<compile_context>
chip_gen: v7x
topology: tpu7x:2x2x1
jax: 0.10.0
libtpu: 0.0.40
codegen_flags: <defaults>
</compile_context>

<pallas_src>
import functools

import jax
import jax.numpy as jnp
from jax.experimental import pallas as pl
from jax.experimental.pallas import tpu as pltpu


# ---------------------------------------------------------------------------
# In-kernel helpers
# ---------------------------------------------------------------------------
def _layernorm(x, g, b, eps=1e-5):
    # x: (T, C);  g, b: (1, C)   (PyTorch LayerNorm over last dim, eps=1e-5)
    mu = jnp.mean(x, axis=-1, keepdims=True)
    var = jnp.mean((x - mu) ** 2, axis=-1, keepdims=True)
    return (x - mu) * jax.lax.rsqrt(var + eps) * g + b


# ---------------------------------------------------------------------------
# Fused transformer-stack kernel.
# Grid = (B, n_layer).  The (T, C) activation for batch b lives in the output
# VMEM block across the whole layer axis; stacked per-layer weights are
# streamed in (auto double-buffered) one layer at a time.
# ---------------------------------------------------------------------------
def gpt_blocks_kernel(x_ref, ln1g_ref, ln1b_ref, wqkv_ref, wo_ref, bo_ref,
                      ln2g_ref, ln2b_ref, w1_ref, b1_ref, w2_ref, b2_ref,
                      o_ref, *, n_head):
    layer = pl.program_id(1)

    @pl.when(layer == 0)
    def _():
        # Bring this batch's activations into the resident output block once.
        o_ref[0] = x_ref[0]

    x = o_ref[0]                                   # (T, C), f32, VMEM-resident
    T, C = x.shape
    hs = C // n_head
    scale = hs ** -0.5
    bf16 = jnp.bfloat16

    # --- self-attention branch ---------------------------------------------
    h = _layernorm(x, ln1g_ref[0], ln1b_ref[0])

    # Fused QKV projection: one (T,C) x (C,3C) MXU matmul, bf16 in / f32 acc.
    qkv = jnp.dot(h.astype(bf16), wqkv_ref[0],
                  preferred_element_type=jnp.float32)          # (T, 3C)
    q = qkv[:, 0 * C:1 * C].reshape(T, n_head, hs)
    k = qkv[:, 1 * C:2 * C].reshape(T, n_head, hs)
    v = qkv[:, 2 * C:3 * C].reshape(T, n_head, hs)

    # Batched over heads; head dim contracted directly (no explicit k.T).
    scores = jnp.einsum('qnd,knd->nqk', q.astype(bf16), k.astype(bf16),
                        preferred_element_type=jnp.float32) * scale

    row = jax.lax.broadcasted_iota(jnp.int32, (T, T), 0)
    col = jax.lax.broadcasted_iota(jnp.int32, (T, T), 1)
    causal = (row >= col)[None, :, :]               # (1, T, T) lower-triangular
    scores = jnp.where(causal, scores, -jnp.inf)

    m = jnp.max(scores, axis=-1, keepdims=True)
    e = jnp.exp(scores - m)
    denom = jnp.sum(e, axis=-1, keepdims=True)
    p = e * pl.reciprocal(denom, approx=True)       # softmax, divide on EUP

    # (n_head,T,T) x (T,n_head,hs) -> (T, n_head, hs), written head-major.
    ctx = jnp.einsum('nqk,knd->qnd', p.astype(bf16), v.astype(bf16),
                     preferred_element_type=jnp.float32)
    sa = ctx.reshape(T, C)
    sa = jnp.dot(sa.astype(bf16), wo_ref[0],
                 preferred_element_type=jnp.float32) + bo_ref[0]
    # dropout (p=0.2) omitted: identity at inference time
    x = x + sa

    # --- feed-forward branch -------------------------------------------------
    h2 = _layernorm(x, ln2g_ref[0], ln2b_ref[0])
    f = jnp.dot(h2.astype(bf16), w1_ref[0],
                preferred_element_type=jnp.float32) + b1_ref[0]
    f = jnp.maximum(f, 0.0)
    f = jnp.dot(f.astype(bf16), w2_ref[0],
                preferred_element_type=jnp.float32) + b2_ref[0]
    x = x + f

    o_ref[0] = x                                    # stays resident until b changes


# ---------------------------------------------------------------------------
# Final kernel: ln_f + lm_head over a (B*T, C) row slab, vocab-tiled.
# ---------------------------------------------------------------------------
def lm_head_kernel(x_ref, g_ref, b_ref, w_ref, bias_ref, o_ref):
    h = _layernorm(x_ref[...], g_ref[...], b_ref[...])        # (TR, C)
    o_ref[...] = (jnp.dot(h.astype(jnp.bfloat16), w_ref[...],
                          preferred_element_type=jnp.float32)
                  + bias_ref[...])


# ---------------------------------------------------------------------------
# pallas_call wrappers
# ---------------------------------------------------------------------------
_VMEM_LIMIT = 48 * 1024 * 1024   # headroom below v7x's 64 MiB physical VMEM


def run_blocks(x, stacked, n_head):
    B, T, C = x.shape
    names = ["ln1_g", "ln1_b", "wqkv", "wo", "bo",
             "ln2_g", "ln2_b", "w1", "b1", "w2", "b2"]
    weights = [stacked[n] for n in names]
    n_layer = stacked["wqkv"].shape[0]

    def wspec(w):
        # one layer's slice of the stacked weight; streamed per layer step
        return pl.BlockSpec((1,) + w.shape[1:], lambda b, l: (l, 0, 0))

    in_specs = [pl.BlockSpec((1, T, C), lambda b, l: (b, 0, 0))]
    in_specs += [wspec(w) for w in weights]

    return pl.pallas_call(
        functools.partial(gpt_blocks_kernel, n_head=n_head),
        out_shape=jax.ShapeDtypeStruct((B, T, C), jnp.float32),
        grid=(B, n_layer),
        in_specs=in_specs,
        out_specs=pl.BlockSpec((1, T, C), lambda b, l: (b, 0, 0)),
        compiler_params=pltpu.CompilerParams(
            dimension_semantics=("parallel", "arbitrary"),
            vmem_limit_bytes=_VMEM_LIMIT),
    )(x, *weights)


def _tile(dim, candidates):
    for c in candidates:
        if c <= dim and dim % c == 0:
            return c
    return dim


def run_lm_head(x2d, params):
    R, C = x2d.shape
    V = params["lm_w"].shape[1]
    TR = _tile(R, (256, 128))                       # sublane-dense row tiles
    TV = _tile(V, (2048, 1024, 512, 256, 128))      # lane-dense vocab tiles
    grid = (R // TR, V // TV)
    return pl.pallas_call(
        lm_head_kernel,
        out_shape=jax.ShapeDtypeStruct((R, V), jnp.float32),
        grid=grid,
        in_specs=[
            pl.BlockSpec((TR, C), lambda i, j: (i, 0)),
            pl.BlockSpec((1, C), lambda i, j: (0, 0)),
            pl.BlockSpec((1, C), lambda i, j: (0, 0)),
            pl.BlockSpec((C, TV), lambda i, j: (0, j)),
            pl.BlockSpec((1, TV), lambda i, j: (0, j)),
        ],
        out_specs=pl.BlockSpec((TR, TV), lambda i, j: (i, j)),
        compiler_params=pltpu.CompilerParams(
            dimension_semantics=("parallel", "parallel"),
            vmem_limit_bytes=_VMEM_LIMIT),
    )(x2d, params["lnf_g"], params["lnf_b"], params["lm_w"], params["lm_b"])


# ---------------------------------------------------------------------------
# Parameter init (deterministic; matches the module's _init_weights:
# N(0, 0.02) for Linear/Embedding weights, zeros for biases, LayerNorm = 1/0).
# Matmul weights are kept in bf16 (f32 accumulation in-kernel).
# ---------------------------------------------------------------------------
def init_params(key, vocab_size, n_embd, n_head, n_layer, block_size):
    C = n_embd
    keys = iter(jax.random.split(key, 4 * n_layer + 3))
    wdt = jnp.bfloat16

    def nrm(shape, dtype=jnp.float32):
        w = 0.02 * jax.random.normal(next(keys), shape, dtype=jnp.float32)
        return w.astype(dtype)

    stacked = {
        "ln1_g": jnp.ones((n_layer, 1, C), jnp.float32),
        "ln1_b": jnp.zeros((n_layer, 1, C), jnp.float32),
        # fused [q | k | v] projections (each head-major along its C columns)
        "wqkv": jnp.stack([nrm((C, 3 * C), wdt) for _ in range(n_layer)]),
        "wo": jnp.stack([nrm((C, C), wdt) for _ in range(n_layer)]),
        "bo": jnp.zeros((n_layer, 1, C), jnp.float32),
        "ln2_g": jnp.ones((n_layer, 1, C), jnp.float32),
        "ln2_b": jnp.zeros((n_layer, 1, C), jnp.float32),
        "w1": jnp.stack([nrm((C, 4 * C), wdt) for _ in range(n_layer)]),
        "b1": jnp.zeros((n_layer, 1, 4 * C), jnp.float32),
        "w2": jnp.stack([nrm((4 * C, C), wdt) for _ in range(n_layer)]),
        "b2": jnp.zeros((n_layer, 1, C), jnp.float32),
    }
    params = {
        "tok_emb": nrm((vocab_size, C)),
        "pos_emb": nrm((block_size, C)),
        "stacked": stacked,
        "lnf_g": jnp.ones((1, C), jnp.float32),
        "lnf_b": jnp.zeros((1, C), jnp.float32),
        "lm_w": nrm((C, vocab_size), wdt),
        "lm_b": jnp.zeros((1, vocab_size), jnp.float32),
    }
    return params


# ---------------------------------------------------------------------------
# Full forward pass (embedding gathers are plain-JAX glue)
# ---------------------------------------------------------------------------
def gpt_forward(idx, params, n_head):
    B, T = idx.shape
    C = params["tok_emb"].shape[1]
    tok = params["tok_emb"][idx]              # (B, T, C) embedding gather
    pos = params["pos_emb"][:T]               # (T, C)
    x = tok + pos[None, :, :]
    # metadata_embedding is None -> no prepended token (matches default call)
    x = run_blocks(x, params["stacked"], n_head)
    logits = run_lm_head(x.reshape(B * T, C), params)
    return logits.reshape(B, T, -1)


if __name__ == "__main__":
    vocab_size = 64
    n_embd = 32
    n_head = 4
    n_layer = 2
    block_size = 8
    B, T = 2, 8

    key = jax.random.PRNGKey(0)
    pkey, dkey = jax.random.split(key)
    params = init_params(pkey, vocab_size, n_embd, n_head, n_layer, block_size)
    idx = jax.random.randint(dkey, (B, T), 0, vocab_size, dtype=jnp.int32)

    logits = gpt_forward(idx, params, n_head)
    logits = jax.block_until_ready(logits)

    assert logits.shape == (B, T, vocab_size), logits.shape
    assert logits.dtype == jnp.float32
    assert bool(jnp.all(jnp.isfinite(logits)))
    print("KERNEL_OK")
</pallas_src>

<mosaic_0001>
module attributes {stable_mosaic.version = 11 : i64} {
  func.func @gpt_blocks_kernel(%arg0: i32, %arg1: i32, %arg2: memref<1x8x32xf32, #tpu.memory_space<vmem>>, %arg3: memref<1x1x32xf32, #tpu.memory_space<vmem>>, %arg4: memref<1x1x32xf32, #tpu.memory_space<vmem>>, %arg5: memref<1x32x96xbf16, #tpu.memory_space<vmem>>, %arg6: memref<1x32x32xbf16, #tpu.memory_space<vmem>>, %arg7: memref<1x1x32xf32, #tpu.memory_space<vmem>>, %arg8: memref<1x1x32xf32, #tpu.memory_space<vmem>>, %arg9: memref<1x1x32xf32, #tpu.memory_space<vmem>>, %arg10: memref<1x32x128xbf16, #tpu.memory_space<vmem>>, %arg11: memref<1x1x128xf32, #tpu.memory_space<vmem>>, %arg12: memref<1x128x32xbf16, #tpu.memory_space<vmem>>, %arg13: memref<1x1x32xf32, #tpu.memory_space<vmem>>, %arg14: memref<1x8x32xf32, #tpu.memory_space<vmem>>) attributes {dimension_semantics = [#tpu.dimension_semantics<parallel>, #tpu.dimension_semantics<arbitrary>], iteration_bounds = array<i64: 2, 2>, scalar_prefetch = 0 : i64, scratch_operands = 0 : i64, tpu.core_type = #tpu.core_type<tc>, window_params = [{transform_indices = @transform_0, window_bounds = array<i64: 1, 8, 32>}, {transform_indices = @transform_1, window_bounds = array<i64: 1, 1, 32>}, {transform_indices = @transform_2, window_bounds = array<i64: 1, 1, 32>}, {transform_indices = @transform_3, window_bounds = array<i64: 1, 32, 96>}, {transform_indices = @transform_4, window_bounds = array<i64: 1, 32, 32>}, {transform_indices = @transform_5, window_bounds = array<i64: 1, 1, 32>}, {transform_indices = @transform_6, window_bounds = array<i64: 1, 1, 32>}, {transform_indices = @transform_7, window_bounds = array<i64: 1, 1, 32>}, {transform_indices = @transform_8, window_bounds = array<i64: 1, 32, 128>}, {transform_indices = @transform_9, window_bounds = array<i64: 1, 1, 128>}, {transform_indices = @transform_10, window_bounds = array<i64: 1, 128, 32>}, {transform_indices = @transform_11, window_bounds = array<i64: 1, 1, 32>}, {transform_indices = @transform_12, window_bounds = array<i64: 1, 8, 32>}]} {
    %c0_i32 = arith.constant 0 : i32
    %0 = arith.cmpi eq, %arg1, %c0_i32 : i32
    %1 = arith.extui %0 : i1 to i32
    %c0_i32_0 = arith.constant 0 : i32
    %2 = arith.cmpi ne, %1, %c0_i32_0 : i32
    scf.if %2 {
      %c0_59 = arith.constant 0 : index
      %c0_60 = arith.constant 0 : index
      %c0_61 = arith.constant 0 : index
      %126 = vector.load %arg2[%c0_59, %c0_60, %c0_61] : memref<1x8x32xf32, #tpu.memory_space<vmem>>, vector<1x8x32xf32>
      %127 = vector.shape_cast %126 : vector<1x8x32xf32> to vector<8x32xf32>
      %c0_62 = arith.constant 0 : index
      %c0_63 = arith.constant 0 : index
      %c0_64 = arith.constant 0 : index
      %128 = vector.load %arg14[%c0_62, %c0_63, %c0_64] : memref<1x8x32xf32, #tpu.memory_space<vmem>>, vector<1x8x32xf32>
      %129 = vector.shape_cast %128 : vector<1x8x32xf32> to vector<8x32xf32>
      %130 = vector.shape_cast %127 : vector<8x32xf32> to vector<1x8x32xf32>
      tpu.vector_store %arg14[%c0_62, %c0_63, %c0_64], %130 {strides = array<i32>} : memref<1x8x32xf32, #tpu.memory_space<vmem>>, vector<1x8x32xf32>,
    } else {
    }
    %c0 = arith.constant 0 : index
    %c0_1 = arith.constant 0 : index
    %c0_2 = arith.constant 0 : index
    %3 = vector.load %arg14[%c0, %c0_1, %c0_2] : memref<1x8x32xf32, #tpu.memory_space<vmem>>, vector<1x8x32xf32>
    %4 = vector.shape_cast %3 : vector<1x8x32xf32> to vector<8x32xf32>
    %c0_3 = arith.constant 0 : index
    %c0_4 = arith.constant 0 : index
    %c0_5 = arith.constant 0 : index
    %5 = vector.load %arg3[%c0_3, %c0_4, %c0_5] : memref<1x1x32xf32, #tpu.memory_space<vmem>>, vector<1x1x32xf32>
    %6 = vector.shape_cast %5 : vector<1x1x32xf32> to vector<1x32xf32>
    %c0_6 = arith.constant 0 : index
    %c0_7 = arith.constant 0 : index
    %c0_8 = arith.constant 0 : index
    %7 = vector.load %arg4[%c0_6, %c0_7, %c0_8] : memref<1x1x32xf32, #tpu.memory_space<vmem>>, vector<1x1x32xf32>
    %8 = vector.shape_cast %7 : vector<1x1x32xf32> to vector<1x32xf32>
    %cst = arith.constant dense<0.000000e+00> : vector<8xf32>
    %9 = vector.multi_reduction <add>, %4, %cst [1] : vector<8x32xf32> to vector<8xf32>
    %10 = vector.shape_cast %9 : vector<8xf32> to vector<8x1xf32>
    %cst_9 = arith.constant 3.200000e+01 : f32
    %11 = vector.broadcast %cst_9 : f32 to vector<8x1xf32>
    %12 = arith.divf %10, %11 : vector<8x1xf32>
    %13 = vector.broadcast %12 : vector<8x1xf32> to vector<8x32xf32>
    %14 = arith.subf %4, %13 : vector<8x32xf32>
    %15 = arith.mulf %14, %14 : vector<8x32xf32>
    %cst_10 = arith.constant dense<0.000000e+00> : vector<8xf32>
    %16 = vector.multi_reduction <add>, %15, %cst_10 [1] : vector<8x32xf32> to vector<8xf32>
    %17 = vector.shape_cast %16 : vector<8xf32> to vector<8x1xf32>
    %cst_11 = arith.constant 3.200000e+01 : f32
    %18 = vector.broadcast %cst_11 : f32 to vector<8x1xf32>
    %19 = arith.divf %17, %18 : vector<8x1xf32>
    %20 = vector.broadcast %12 : vector<8x1xf32> to vector<8x32xf32>
    %21 = arith.subf %4, %20 : vector<8x32xf32>
    %cst_12 = arith.constant 9.99999974E-6 : f32
    %22 = vector.broadcast %cst_12 : f32 to vector<8x1xf32>
    %23 = arith.addf %19, %22 : vector<8x1xf32>
    %24 = math.rsqrt %23 : vector<8x1xf32>
    %25 = vector.broadcast %24 : vector<8x1xf32> to vector<8x32xf32>
    %26 = arith.mulf %21, %25 : vector<8x32xf32>
    %27 = vector.broadcast %6 : vector<1x32xf32> to vector<8x32xf32>
    %28 = arith.mulf %26, %27 : vector<8x32xf32>
    %29 = vector.broadcast %8 : vector<1x32xf32> to vector<8x32xf32>
    %30 = arith.addf %28, %29 : vector<8x32xf32>
    %31 = arith.truncf %30 : vector<8x32xf32> to vector<8x32xbf16>
    %c0_13 = arith.constant 0 : index
    %c0_14 = arith.constant 0 : index
    %c0_15 = arith.constant 0 : index
    %32 = vector.load %arg5[%c0_13, %c0_14, %c0_15] : memref<1x32x96xbf16, #tpu.memory_space<vmem>>, vector<1x32x96xbf16>
    %33 = vector.shape_cast %32 : vector<1x32x96xbf16> to vector<32x96xbf16>
    %cst_16 = arith.constant dense<0.000000e+00> : vector<8x96xf32>
    %34 = tpu.matmul %31, %33, %cst_16 {dimension_numbers = #tpu.dot_dimension_numbers<[1], [0], [0], [1], [0, 0, 1, 1], [], []>} : vector<8x32xbf16>, vector<32x96xbf16>, vector<8x96xf32> -> vector<8x96xf32>
    %35 = vector.extract_strided_slice %34 {offsets = [0, 0], sizes = [8, 32], strides = [1, 1]} : vector<8x96xf32> to vector<8x32xf32>
    %36 = vector.shape_cast %35 : vector<8x32xf32> to vector<8x4x8xf32>
    %37 = vector.extract_strided_slice %34 {offsets = [0, 32], sizes = [8, 32], strides = [1, 1]} : vector<8x96xf32> to vector<8x32xf32>
    %38 = vector.shape_cast %37 : vector<8x32xf32> to vector<8x4x8xf32>
    %39 = vector.extract_strided_slice %34 {offsets = [0, 64], sizes = [8, 32], strides = [1, 1]} : vector<8x96xf32> to vector<8x32xf32>
    %40 = vector.shape_cast %39 : vector<8x32xf32> to vector<8x4x8xf32>
    %41 = arith.truncf %36 : vector<8x4x8xf32> to vector<8x4x8xbf16>
    %42 = arith.truncf %38 : vector<8x4x8xf32> to vector<8x4x8xbf16>
    "tpu.trace_start"() <{level = 10 : i32, message = "qnd,knd->nqk"}> : () -> ()
    %cst_17 = arith.constant dense<0.000000e+00> : vector<4x8x8xf32>
    %43 = tpu.matmul %41, %42, %cst_17 {dimension_numbers = #tpu.dot_dimension_numbers<[2], [2], [0], [0], [0, 1, 0, 0, 1, 0], [1], [1]>} : vector<8x4x8xbf16>, vector<8x4x8xbf16>, vector<4x8x8xf32> -> vector<4x8x8xf32>
    "tpu.trace_stop"() : () -> ()
    %cst_18 = arith.constant 0.353553385 : f32
    %44 = vector.broadcast %cst_18 : f32 to vector<4x8x8xf32>
    %45 = arith.mulf %43, %44 : vector<4x8x8xf32>
    %46 = tpu.iota {dimensions = array<i32: 0>} : vector<8x8xi32>
    %47 = tpu.iota {dimensions = array<i32: 1>} : vector<8x8xi32>
    %48 = arith.cmpi sge, %46, %47 : vector<8x8xi32>
    %49 = vector.shape_cast %48 : vector<8x8xi1> to vector<1x8x8xi1>
    %cst_19 = arith.constant 0xFF800000 : f32
    %50 = vector.shape_cast %49 : vector<1x8x8xi1> to vector<1x8x8xi1>
    %51 = vector.broadcast %50 : vector<1x8x8xi1> to vector<4x8x8xi1>
    %52 = vector.broadcast %cst_19 : f32 to vector<4x8x8xf32>
    %53 = arith.select %51, %45, %52 : vector<4x8x8xi1>, vector<4x8x8xf32>
    %cst_20 = arith.constant dense<0xFF800000> : vector<4x8xf32>
    %54 = vector.multi_reduction <maximumf>, %53, %cst_20 [2] : vector<4x8x8xf32> to vector<4x8xf32>
    %55 = vector.shape_cast %54 : vector<4x8xf32> to vector<4x8x1xf32>
    %56 = vector.broadcast %55 : vector<4x8x1xf32> to vector<4x8x8xf32>
    %57 = arith.subf %53, %56 : vector<4x8x8xf32>
    %58 = math.exp %57 : vector<4x8x8xf32>
    %cst_21 = arith.constant dense<0.000000e+00> : vector<4x8xf32>
    %59 = vector.multi_reduction <add>, %58, %cst_21 [2] : vector<4x8x8xf32> to vector<4x8xf32>
    %60 = vector.shape_cast %59 : vector<4x8xf32> to vector<4x8x1xf32>
    %61 = tpu.reciprocal %60 {approx = true} : vector<4x8x1xf32> -> vector<4x8x1xf32>
    %62 = vector.broadcast %61 : vector<4x8x1xf32> to vector<4x8x8xf32>
    %63 = arith.mulf %58, %62 : vector<4x8x8xf32>
    %64 = arith.truncf %63 : vector<4x8x8xf32> to vector<4x8x8xbf16>
    %65 = arith.truncf %40 : vector<8x4x8xf32> to vector<8x4x8xbf16>
    "tpu.trace_start"() <{level = 10 : i32, message = "nqk,knd->qnd"}> : () -> ()
    %cst_22 = arith.constant dense<0.000000e+00> : vector<4x8x8xf32>
    %66 = tpu.matmul %65, %64, %cst_22 {dimension_numbers = #tpu.dot_dimension_numbers<[0], [2], [2], [1], [0, 1, 0, 2, 1, 1], [1], [0]>} : vector<8x4x8xbf16>, vector<4x8x8xbf16>, vector<4x8x8xf32> -> vector<4x8x8xf32>
    %67 = tpu.transpose %66, [2, 0, 1] : vector<4x8x8xf32> -> vector<8x4x8xf32>
    "tpu.trace_stop"() : () -> ()
    %68 = vector.shape_cast %67 : vector<8x4x8xf32> to vector<8x32xf32>
    %69 = arith.truncf %68 : vector<8x32xf32> to vector<8x32xbf16>
    %c0_23 = arith.constant 0 : index
    %c0_24 = arith.constant 0 : index
    %c0_25 = arith.constant 0 : index
    %70 = vector.load %arg6[%c0_23, %c0_24, %c0_25] : memref<1x32x32xbf16, #tpu.memory_space<vmem>>, vector<1x32x32xbf16>
    %71 = vector.shape_cast %70 : vector<1x32x32xbf16> to vector<32x32xbf16>
    %cst_26 = arith.constant dense<0.000000e+00> : vector<8x32xf32>
    %72 = tpu.matmul %69, %71, %cst_26 {dimension_numbers = #tpu.dot_dimension_numbers<[1], [0], [0], [1], [0, 0, 1, 1], [], []>} : vector<8x32xbf16>, vector<32x32xbf16>, vector<8x32xf32> -> vector<8x32xf32>
    %c0_27 = arith.constant 0 : index
    %c0_28 = arith.constant 0 : index
    %c0_29 = arith.constant 0 : index
    %73 = vector.load %arg7[%c0_27, %c0_28, %c0_29] : memref<1x1x32xf32, #tpu.memory_space<vmem>>, vector<1x1x32xf32>
    %74 = vector.shape_cast %73 : vector<1x1x32xf32> to vector<1x32xf32>
    %75 = vector.broadcast %74 : vector<1x32xf32> to vector<8x32xf32>
    %76 = arith.addf %72, %75 : vector<8x32xf32>
    %77 = arith.addf %4, %76 : vector<8x32xf32>
    %c0_30 = arith.constant 0 : index
    %c0_31 = arith.constant 0 : index
    %c0_32 = arith.constant 0 : index
    %78 = vector.load %arg8[%c0_30, %c0_31, %c0_32] : memref<1x1x32xf32, #tpu.memory_space<vmem>>, vector<1x1x32xf32>
    %79 = vector.shape_cast %78 : vector<1x1x32xf32> to vector<1x32xf32>
    %c0_33 = arith.constant 0 : index
    %c0_34 = arith.constant 0 : index
    %c0_35 = arith.constant 0 : index
    %80 = vector.load %arg9[%c0_33, %c0_34, %c0_35] : memref<1x1x32xf32, #tpu.memory_space<vmem>>, vector<1x1x32xf32>
    %81 = vector.shape_cast %80 : vector<1x1x32xf32> to vector<1x32xf32>
    %cst_36 = arith.constant dense<0.000000e+00> : vector<8xf32>
    %82 = vector.multi_reduction <add>, %77, %cst_36 [1] : vector<8x32xf32> to vector<8xf32>
    %83 = vector.shape_cast %82 : vector<8xf32> to vector<8x1xf32>
    %cst_37 = arith.constant 3.200000e+01 : f32
    %84 = vector.broadcast %cst_37 : f32 to vector<8x1xf32>
    %85 = arith.divf %83, %84 : vector<8x1xf32>
    %86 = vector.broadcast %85 : vector<8x1xf32> to vector<8x32xf32>
    %87 = arith.subf %77, %86 : vector<8x32xf32>
    %88 = arith.mulf %87, %87 : vector<8x32xf32>
    %cst_38 = arith.constant dense<0.000000e+00> : vector<8xf32>
    %89 = vector.multi_reduction <add>, %88, %cst_38 [1] : vector<8x32xf32> to vector<8xf32>
    %90 = vector.shape_cast %89 : vector<8xf32> to vector<8x1xf32>
    %cst_39 = arith.constant 3.200000e+01 : f32
    %91 = vector.broadcast %cst_39 : f32 to vector<8x1xf32>
    %92 = arith.divf %90, %91 : vector<8x1xf32>
    %93 = vector.broadcast %85 : vector<8x1xf32> to vector<8x32xf32>
    %94 = arith.subf %77, %93 : vector<8x32xf32>
    %cst_40 = arith.constant 9.99999974E-6 : f32
    %95 = vector.broadcast %cst_40 : f32 to vector<8x1xf32>
    %96 = arith.addf %92, %95 : vector<8x1xf32>
    %97 = math.rsqrt %96 : vector<8x1xf32>
    %98 = vector.broadcast %97 : vector<8x1xf32> to vector<8x32xf32>
    %99 = arith.mulf %94, %98 : vector<8x32xf32>
    %100 = vector.broadcast %79 : vector<1x32xf32> to vector<8x32xf32>
    %101 = arith.mulf %99, %100 : vector<8x32xf32>
    %102 = vector.broadcast %81 : vector<1x32xf32> to vector<8x32xf32>
    %103 = arith.addf %101, %102 : vector<8x32xf32>
    %104 = arith.truncf %103 : vector<8x32xf32> to vector<8x32xbf16>
    %c0_41 = arith.constant 0 : index
    %c0_42 = arith.constant 0 : index
    %c0_43 = arith.constant 0 : index
    %105 = vector.load %arg10[%c0_41, %c0_42, %c0_43] : memref<1x32x128xbf16, #tpu.memory_space<vmem>>, vector<1x32x128xbf16>
    %106 = vector.shape_cast %105 : vector<1x32x128xbf16> to vector<32x128xbf16>
    %cst_44 = arith.constant dense<0.000000e+00> : vector<8x128xf32>
    %107 = tpu.matmul %104, %106, %cst_44 {dimension_numbers = #tpu.dot_dimension_numbers<[1], [0], [0], [1], [0, 0, 1, 1], [], []>} : vector<8x32xbf16>, vector<32x128xbf16>, vector<8x128xf32> -> vector<8x128xf32>
    %c0_45 = arith.constant 0 : index
    %c0_46 = arith.constant 0 : index
    %c0_47 = arith.constant 0 : index
    %108 = vector.load %arg11[%c0_45, %c0_46, %c0_47] : memref<1x1x128xf32, #tpu.memory_space<vmem>>, vector<1x1x128xf32>
    %109 = vector.shape_cast %108 : vector<1x1x128xf32> to vector<1x128xf32>
    %110 = vector.broadcast %109 : vector<1x128xf32> to vector<8x128xf32>
    %111 = arith.addf %107, %110 : vector<8x128xf32>
    %cst_48 = arith.constant 0.000000e+00 : f32
    %112 = vector.broadcast %cst_48 : f32 to vector<8x128xf32>
    %113 = arith.maximumf %111, %112 : vector<8x128xf32>
    %114 = arith.truncf %113 : vector<8x128xf32> to vector<8x128xbf16>
    %c0_49 = arith.constant 0 : index
    %c0_50 = arith.constant 0 : index
    %c0_51 = arith.constant 0 : index
    %115 = vector.load %arg12[%c0_49, %c0_50, %c0_51] : memref<1x128x32xbf16, #tpu.memory_space<vmem>>, vector<1x128x32xbf16>
    %116 = vector.shape_cast %115 : vector<1x128x32xbf16> to vector<128x32xbf16>
    %cst_52 = arith.constant dense<0.000000e+00> : vector<8x32xf32>
    %117 = tpu.matmul %114, %116, %cst_52 {dimension_numbers = #tpu.dot_dimension_numbers<[1], [0], [0], [1], [0, 0, 1, 1], [], []>} : vector<8x128xbf16>, vector<128x32xbf16>, vector<8x32xf32> -> vector<8x32xf32>
    %c0_53 = arith.constant 0 : index
    %c0_54 = arith.constant 0 : index
    %c0_55 = arith.constant 0 : index
    %118 = vector.load %arg13[%c0_53, %c0_54, %c0_55] : memref<1x1x32xf32, #tpu.memory_space<vmem>>, vector<1x1x32xf32>
    %119 = vector.shape_cast %118 : vector<1x1x32xf32> to vector<1x32xf32>
    %120 = vector.broadcast %119 : vector<1x32xf32> to vector<8x32xf32>
    %121 = arith.addf %117, %120 : vector<8x32xf32>
    %122 = arith.addf %77, %121 : vector<8x32xf32>
    %c0_56 = arith.constant 0 : index
    %c0_57 = arith.constant 0 : index
    %c0_58 = arith.constant 0 : index
    %123 = vector.load %arg14[%c0_56, %c0_57, %c0_58] : memref<1x8x32xf32, #tpu.memory_space<vmem>>, vector<1x8x32xf32>
    %124 = vector.shape_cast %123 : vector<1x8x32xf32> to vector<8x32xf32>
    %125 = vector.shape_cast %122 : vector<8x32xf32> to vector<1x8x32xf32>
    tpu.vector_store %arg14[%c0_56, %c0_57, %c0_58], %125 {strides = array<i32>} : memref<1x8x32xf32, #tpu.memory_space<vmem>>, vector<1x8x32xf32>,
    return
  }
  func.func @transform_0(%arg0: i32, %arg1: i32) -> (i32, i32, i32) {
    %c0_i32 = arith.constant 0 : i32
    %c0_i32_0 = arith.constant 0 : i32
    %c0_i32_1 = arith.constant 0 : i32
    return %arg0, %c0_i32, %c0_i32_0 : i32, i32, i32
  }
  func.func @transform_1(%arg0: i32, %arg1: i32) -> (i32, i32, i32) {
    %c0_i32 = arith.constant 0 : i32
    %c0_i32_0 = arith.constant 0 : i32
    %c0_i32_1 = arith.constant 0 : i32
    return %arg1, %c0_i32, %c0_i32_0 : i32, i32, i32
  }
  func.func @transform_2(%arg0: i32, %arg1: i32) -> (i32, i32, i32) {
    %c0_i32 = arith.constant 0 : i32
    %c0_i32_0 = arith.constant 0 : i32
    %c0_i32_1 = arith.constant 0 : i32
    return %arg1, %c0_i32, %c0_i32_0 : i32, i32, i32
  }
  func.func @transform_3(%arg0: i32, %arg1: i32) -> (i32, i32, i32) {
    %c0_i32 = arith.constant 0 : i32
    %c0_i32_0 = arith.constant 0 : i32
    %c0_i32_1 = arith.constant 0 : i32
    return %arg1, %c0_i32, %c0_i32_0 : i32, i32, i32
  }
  func.func @transform_4(%arg0: i32, %arg1: i32) -> (i32, i32, i32) {
    %c0_i32 = arith.constant 0 : i32
    %c0_i32_0 = arith.constant 0 : i32
    %c0_i32_1 = arith.constant 0 : i32
    return %arg1, %c0_i32, %c0_i32_0 : i32, i32, i32
  }
  func.func @transform_5(%arg0: i32, %arg1: i32) -> (i32, i32, i32) {
    %c0_i32 = arith.constant 0 : i32
    %c0_i32_0 = arith.constant 0 : i32
    %c0_i32_1 = arith.constant 0 : i32
    return %arg1, %c0_i32, %c0_i32_0 : i32, i32, i32
  }
  func.func @transform_6(%arg0: i32, %arg1: i32) -> (i32, i32, i32) {
    %c0_i32 = arith.constant 0 : i32
    %c0_i32_0 = arith.constant 0 : i32
    %c0_i32_1 = arith.constant 0 : i32
    return %arg1, %c0_i32, %c0_i32_0 : i32, i32, i32
  }
  func.func @transform_7(%arg0: i32, %arg1: i32) -> (i32, i32, i32) {
    %c0_i32 = arith.constant 0 : i32
    %c0_i32_0 = arith.constant 0 : i32
    %c0_i32_1 = arith.constant 0 : i32
    return %arg1, %c0_i32, %c0_i32_0 : i32, i32, i32
  }
  func.func @transform_8(%arg0: i32, %arg1: i32) -> (i32, i32, i32) {
    %c0_i32 = arith.constant 0 : i32
    %c0_i32_0 = arith.constant 0 : i32
    %c0_i32_1 = arith.constant 0 : i32
    return %arg1, %c0_i32, %c0_i32_0 : i32, i32, i32
  }
  func.func @transform_9(%arg0: i32, %arg1: i32) -> (i32, i32, i32) {
    %c0_i32 = arith.constant 0 : i32
    %c0_i32_0 = arith.constant 0 : i32
    %c0_i32_1 = arith.constant 0 : i32
    return %arg1, %c0_i32, %c0_i32_0 : i32, i32, i32
  }
  func.func @transform_10(%arg0: i32, %arg1: i32) -> (i32, i32, i32) {
    %c0_i32 = arith.constant 0 : i32
    %c0_i32_0 = arith.constant 0 : i32
    %c0_i32_1 = arith.constant 0 : i32
    return %arg1, %c0_i32, %c0_i32_0 : i32, i32, i32
  }
  func.func @transform_11(%arg0: i32, %arg1: i32) -> (i32, i32, i32) {
    %c0_i32 = arith.constant 0 : i32
    %c0_i32_0 = arith.constant 0 : i32
    %c0_i32_1 = arith.constant 0 : i32
    return %arg1, %c0_i32, %c0_i32_0 : i32, i32, i32
  }
  func.func @transform_12(%arg0: i32, %arg1: i32) -> (i32, i32, i32) {
    %c0_i32 = arith.constant 0 : i32
    %c0_i32_0 = arith.constant 0 : i32
    %c0_i32_1 = arith.constant 0 : i32
    return %arg0, %c0_i32, %c0_i32_0 : i32, i32, i32
  }
}

</mosaic_0001>

<llo_original>
// kernel: tpu_custom_call.1
$region0: #{tpu_custom_call.1}
  #allocation0 [shape = 'u32[]', space=smem, size = 0x4, offset = 0x4, fixed_abs, tag = 'smem constant byte address 0x4 - core index']
  #allocation1 [shape = 'u32[144,128]{1,0:T(1,128)}', space=vmem, size = 0x12000, scoped, tag = 'internal scratch']
  %s0 = inlined_call_operand.vmem [shape: f32[2,8,32], index: 0, kind: input, shape index: {}]
  %s1 = inlined_call_operand.vmem [shape: f32[2,1,32], index: 1, kind: input, shape index: {}]
  %s2 = inlined_call_operand.vmem [shape: f32[2,1,32], index: 2, kind: input, shape index: {}]
  %s3 = inlined_call_operand.vmem [shape: bf16[2,32,96], index: 3, kind: input, shape index: {}]
  %s4 = inlined_call_operand.vmem [shape: bf16[2,32,32], index: 4, kind: input, shape index: {}]
  %s5 = inlined_call_operand.vmem [shape: f32[2,1,32], index: 5, kind: input, shape index: {}]
  %s6 = inlined_call_operand.vmem [shape: f32[2,1,32], index: 6, kind: input, shape index: {}]
  %s7 = inlined_call_operand.vmem [shape: f32[2,1,32], index: 7, kind: input, shape index: {}]
  %s8 = inlined_call_operand.vmem [shape: bf16[2,32,128], index: 8, kind: input, shape index: {}]
  %s9 = inlined_call_operand.vmem [shape: f32[2,1,128], index: 9, kind: input, shape index: {}]
  %s10 = inlined_call_operand.vmem [shape: bf16[2,128,32], index: 10, kind: input, shape index: {}]
  %s11 = inlined_call_operand.vmem [shape: f32[2,1,32], index: 11, kind: input, shape index: {}]
  %s12 = inlined_call_operand.hbm [shape: f32[2,8,32], index: 12, kind: output, shape index: {}]
  %s13 = sld [smem:[#allocation0]]
  $region85: #{tpu_custom_call.1} parent=0
    _
  %s15 = ssub.s32 1, %s13
  %s16 = scalar_select 0, %s15, %s13
  $region1: #{tpu_custom_call.1} parent=0
    #allocation2 [shape = 'u8[8192]{0}', space=vmem, size = 0x2000, scoped, tag = 'output window, operand 0']
    #allocation3 [shape = 's32[2]{0}', space=sflag, size = 0x8, scoped, tag = 'scoped memory for tpu_custom_call.1']
    %17 = vsyncpa [#allocation3], 0
    %s18 = scalar_lea.sflag [#allocation3], 1
    %19 = vsyncpa %s18, 0
    loop: start=0, step=1, limit=6
    $region2: #{tpu_custom_call.1} parent=1 // loop_pre_header
      _
    $region3: #{tpu_custom_call.1} parent=1 // loop_header
      %s21 = sphi 0, %s25
      %p22 = scmp.ge.s32.totalorder %s21, 6
      %s28 = sphi 0, %s40
      %s29 = sphi 0, %s36
      %s30 = sphi 0, %s28
      %s31 = sphi 0, %s29
      %s32 = sphi 0, %s30
      %s33 = sphi 0, %s31
      %s43 = sphi 0, %s45
      %s46 = sphi 0, %s43
      %s47 = sphi 0, %s46
      %s63 = sphi 0, %s47
      %s69 = sphi 0, %s71
      %s72 = sphi 0, %s69
      %s73 = sphi 0, %s72
      %s89 = sphi 0, %s73
      %s95 = sphi 0, %s97
      %s98 = sphi 0, %s95
      %s99 = sphi 0, %s98
      %s115 = sphi 0, %s99
      %s121 = sphi 0, %s123
      %s124 = sphi 0, %s121
      %s125 = sphi 0, %s124
      %s141 = sphi 0, %s125
      %s147 = sphi 0, %s149
      %s150 = sphi 0, %s147
      %s151 = sphi 0, %s150
      %s167 = sphi 0, %s151
      %s173 = sphi 0, %s175
      %s176 = sphi 0, %s173
      %s177 = sphi 0, %s176
      %s193 = sphi 0, %s177
      %s199 = sphi 0, %s201
      %s202 = sphi 0, %s199
      %s203 = sphi 0, %s202
      %s219 = sphi 0, %s203
      %s225 = sphi 0, %s227
      %s228 = sphi 0, %s225
      %s229 = sphi 0, %s228
      %s245 = sphi 0, %s229
      %s251 = sphi 0, %s253
      %s254 = sphi 0, %s251
      %s255 = sphi 0, %s254
      %s271 = sphi 0, %s255
      %s277 = sphi 0, %s279
      %s280 = sphi 0, %s277
      %s281 = sphi 0, %s280
      %s297 = sphi 0, %s281
      %s303 = sphi 0, %s305
      %s306 = sphi 0, %s303
      %s307 = sphi 0, %s306
      %s323 = sphi 0, %s307
      %s329 = sphi 0, %s331
      %s332 = sphi 0, %s329
      %s333 = sphi 0, %s332
      %s349 = sphi 0, %s333
      %s355 = sphi 0, %s357
      %s358 = sphi 0, %s355
      %s359 = sphi 0, %s358
      %s375 = sphi 0, %s359
    $region4: #{tpu_custom_call.1} parent=1 // loop_header_branch
      %24 = sbr.rel (%p22) target = $region8
    $region5: #{tpu_custom_call.1} parent=1 // loop_body
      %s26 = ssub.s32 %s21, 1
      %s27 = ssub.s32 %s21, 2
      %s34 = sadd.s32 1, %s29
      %p35 = scmp.ge.s32.totalorder %s34, 2
      %s36 = scalar_select %p35, 0, %s34
      %s37 = sadd.s32 1, %s28
      %s38 = scalar_select %p35, %s37, %s28
      %p39 = scmp.ge.s32.totalorder %s38, 2
      %s40 = scalar_select %p39, 0, %s38
      %s41 = ssub.s32 %s28, %s40
      %p42 = scmp.eq.s32.totalorder %s41, 0
      %s44 = sadd.s32 %s43, 1
      %s45 = scalar_select %p42, %s43, %s44
      %p48 = pneg %p42
      %p49 = scmp.eq.s32.totalorder %s21, 3
      %p50 = por %p48, %p49
      %p51 = scmp.ne.s32.totalorder %s43, %s46
      %p52 = scmp.eq.s32.totalorder %s21, 0
      %p53 = por %p51, %p52
      %p54 = scmp.ne.s32.totalorder %s43, %s46
      %p55 = scmp.eq.s32.totalorder %s26, 3
      %p56 = por %p54, %p55
      %p57 = scmp.ne.s32.totalorder %s46, %s47
      %p58 = scmp.eq.s32.totalorder %s26, 0
      %p59 = por %p57, %p58
      %p60 = scmp.ne.s32.totalorder %s46, %s47
      %p61 = scmp.eq.s32.totalorder %s27, 3
      %p62 = por %p60, %p61
      %p64 = scmp.ne.s32.totalorder %s47, %s63
      %p65 = scmp.eq.s32.totalorder %s27, 0
      %p66 = por %p64, %p65
      %s67 = ssub.s32 %s29, %s36
      %p68 = scmp.eq.s32.totalorder %s67, 0
      %s70 = sadd.s32 %s69, 1
      %s71 = scalar_select %p68, %s69, %s70
      %p74 = pneg %p68
      %p75 = scmp.eq.s32.totalorder %s21, 3
      %p76 = por %p74, %p75
      %p77 = scmp.ne.s32.totalorder %s69, %s72
      %p78 = scmp.eq.s32.totalorder %s21, 0
      %p79 = por %p77, %p78
      %p80 = scmp.ne.s32.totalorder %s69, %s72
      %p81 = scmp.eq.s32.totalorder %s26, 3
      %p82 = por %p80, %p81
      %p83 = scmp.ne.s32.totalorder %s72, %s73
      %p84 = scmp.eq.s32.totalorder %s26, 0
      %p85 = por %p83, %p84
      %p86 = scmp.ne.s32.totalorder %s72, %s73
      %p87 = scmp.eq.s32.totalorder %s27, 3
      %p88 = por %p86, %p87
      %p90 = scmp.ne.s32.totalorder %s73, %s89
      %p91 = scmp.eq.s32.totalorder %s27, 0
      %p92 = por %p90, %p91
      %s93 = ssub.s32 %s29, %s36
      %p94 = scmp.eq.s32.totalorder %s93, 0
      %s96 = sadd.s32 %s95, 1
      %s97 = scalar_select %p94, %s95, %s96
      %p100 = pneg %p94
      %p101 = scmp.eq.s32.totalorder %s21, 3
      %p102 = por %p100, %p101
      %p103 = scmp.ne.s32.totalorder %s95, %s98
      %p104 = scmp.eq.s32.totalorder %s21, 0
      %p105 = por %p103, %p104
      %p106 = scmp.ne.s32.totalorder %s95, %s98
      %p107 = scmp.eq.s32.totalorder %s26, 3
      %p108 = por %p106, %p107
      %p109 = scmp.ne.s32.totalorder %s98, %s99
      %p110 = scmp.eq.s32.totalorder %s26, 0
      %p111 = por %p109, %p110
      %p112 = scmp.ne.s32.totalorder %s98, %s99
      %p113 = scmp.eq.s32.totalorder %s27, 3
      %p114 = por %p112, %p113
      %p116 = scmp.ne.s32.totalorder %s99, %s115
      %p117 = scmp.eq.s32.totalorder %s27, 0
      %p118 = por %p116, %p117
      %s119 = ssub.s32 %s29, %s36
      %p120 = scmp.eq.s32.totalorder %s119, 0
      %s122 = sadd.s32 %s121, 1
      %s123 = scalar_select %p120, %s121, %s122
      %p126 = pneg %p120
      %p127 = scmp.eq.s32.totalorder %s21, 3
      %p128 = por %p126, %p127
      %p129 = scmp.ne.s32.totalorder %s121, %s124
      %p130 = scmp.eq.s32.totalorder %s21, 0
      %p131 = por %p129, %p130
      %p132 = scmp.ne.s32.totalorder %s121, %s124
      %p133 = scmp.eq.s32.totalorder %s26, 3
      %p134 = por %p132, %p133
      %p135 = scmp.ne.s32.totalorder %s124, %s125
      %p136 = scmp.eq.s32.totalorder %s26, 0
      %p137 = por %p135, %p136
      %p138 = scmp.ne.s32.totalorder %s124, %s125
      %p139 = scmp.eq.s32.totalorder %s27, 3
      %p140 = por %p138, %p139
      %p142 = scmp.ne.s32.totalorder %s125, %s141
      %p143 = scmp.eq.s32.totalorder %s27, 0
      %p144 = por %p142, %p143
      %s145 = ssub.s32 %s29, %s36
      %p146 = scmp.eq.s32.totalorder %s145, 0
      %s148 = sadd.s32 %s147, 1
      %s149 = scalar_select %p146, %s147, %s148
      %p152 = pneg %p146
      %p153 = scmp.eq.s32.totalorder %s21, 3
      %p154 = por %p152, %p153
      %p155 = scmp.ne.s32.totalorder %s147, %s150
      %p156 = scmp.eq.s32.totalorder %s21, 0
      %p157 = por %p155, %p156
      %p158 = scmp.ne.s32.totalorder %s147, %s150
      %p159 = scmp.eq.s32.totalorder %s26, 3
      %p160 = por %p158, %p159
      %p161 = scmp.ne.s32.totalorder %s150, %s151
      %p162 = scmp.eq.s32.totalorder %s26, 0
      %p163 = por %p161, %p162
      %p164 = scmp.ne.s32.totalorder %s150, %s151
      %p165 = scmp.eq.s32.totalorder %s27, 3
      %p166 = por %p164, %p165
      %p168 = scmp.ne.s32.totalorder %s151, %s167
      %p169 = scmp.eq.s32.totalorder %s27, 0
      %p170 = por %p168, %p169
      %s171 = ssub.s32 %s29, %s36
      %p172 = scmp.eq.s32.totalorder %s171, 0
      %s174 = sadd.s32 %s173, 1
      %s175 = scalar_select %p172, %s173, %s174
      %p178 = pneg %p172
      %p179 = scmp.eq.s32.totalorder %s21, 3
      %p180 = por %p178, %p179
      %p181 = scmp.ne.s32.totalorder %s173, %s176
      %p182 = scmp.eq.s32.totalorder %s21, 0
      %p183 = por %p181, %p182
      %p184 = scmp.ne.s32.totalorder %s173, %s176
      %p185 = scmp.eq.s32.totalorder %s26, 3
      %p186 = por %p184, %p185
      %p187 = scmp.ne.s32.totalorder %s176, %s177
      %p188 = scmp.eq.s32.totalorder %s26, 0
      %p189 = por %p187, %p188
      %p190 = scmp.ne.s32.totalorder %s176, %s177
      %p191 = scmp.eq.s32.totalorder %s27, 3
      %p192 = por %p190, %p191
      %p194 = scmp.ne.s32.totalorder %s177, %s193
      %p195 = scmp.eq.s32.totalorder %s27, 0
      %p196 = por %p194, %p195
      %s197 = ssub.s32 %s29, %s36
      %p198 = scmp.eq.s32.totalorder %s197, 0
      %s200 = sadd.s32 %s199, 1
      %s201 = scalar_select %p198, %s199, %s200
      %p204 = pneg %p198
      %p205 = scmp.eq.s32.totalorder %s21, 3
      %p206 = por %p204, %p205
      %p207 = scmp.ne.s32.totalorder %s199, %s202
      %p208 = scmp.eq.s32.totalorder %s21, 0
      %p209 = por %p207, %p208
      %p210 = scmp.ne.s32.totalorder %s199, %s202
      %p211 = scmp.eq.s32.totalorder %s26, 3
      %p212 = por %p210, %p211
      %p213 = scmp.ne.s32.totalorder %s202, %s203
      %p214 = scmp.eq.s32.totalorder %s26, 0
      %p215 = por %p213, %p214
      %p216 = scmp.ne.s32.totalorder %s202, %s203
      %p217 = scmp.eq.s32.totalorder %s27, 3
      %p218 = por %p216, %p217
      %p220 = scmp.ne.s32.totalorder %s203, %s219
      %p221 = scmp.eq.s32.totalorder %s27, 0
      %p222 = por %p220, %p221
      %s223 = ssub.s32 %s29, %s36
      %p224 = scmp.eq.s32.totalorder %s223, 0
      %s226 = sadd.s32 %s225, 1
      %s227 = scalar_select %p224, %s225, %s226
      %p230 = pneg %p224
      %p231 = scmp.eq.s32.totalorder %s21, 3
      %p232 = por %p230, %p231
      %p233 = scmp.ne.s32.totalorder %s225, %s228
      %p234 = scmp.eq.s32.totalorder %s21, 0
      %p235 = por %p233, %p234
      %p236 = scmp.ne.s32.totalorder %s225, %s228
      %p237 = scmp.eq.s32.totalorder %s26, 3
      %p238 = por %p236, %p237
      %p239 = scmp.ne.s32.totalorder %s228, %s229
      %p240 = scmp.eq.s32.totalorder %s26, 0
      %p241 = por %p239, %p240
      %p242 = scmp.ne.s32.totalorder %s228, %s229
      %p243 = scmp.eq.s32.totalorder %s27, 3
      %p244 = por %p242, %p243
      %p246 = scmp.ne.s32.totalorder %s229, %s245
      %p247 = scmp.eq.s32.totalorder %s27, 0
      %p248 = por %p246, %p247
      %s249 = ssub.s32 %s29, %s36
      %p250 = scmp.eq.s32.totalorder %s249, 0
      %s252 = sadd.s32 %s251, 1
      %s253 = scalar_select %p250, %s251, %s252
      %p256 = pneg %p250
      %p257 = scmp.eq.s32.totalorder %s21, 3
      %p258 = por %p256, %p257
      %p259 = scmp.ne.s32.totalorder %s251, %s254
      %p260 = scmp.eq.s32.totalorder %s21, 0
      %p261 = por %p259, %p260
      %p262 = scmp.ne.s32.totalorder %s251, %s254
      %p263 = scmp.eq.s32.totalorder %s26, 3
      %p264 = por %p262, %p263
      %p265 = scmp.ne.s32.totalorder %s254, %s255
      %p266 = scmp.eq.s32.totalorder %s26, 0
      %p267 = por %p265, %p266
      %p268 = scmp.ne.s32.totalorder %s254, %s255
      %p269 = scmp.eq.s32.totalorder %s27, 3
      %p270 = por %p268, %p269
      %p272 = scmp.ne.s32.totalorder %s255, %s271
      %p273 = scmp.eq.s32.totalorder %s27, 0
      %p274 = por %p272, %p273
      %s275 = ssub.s32 %s29, %s36
      %p276 = scmp.eq.s32.totalorder %s275, 0
      %s278 = sadd.s32 %s277, 1
      %s279 = scalar_select %p276, %s277, %s278
      %p282 = pneg %p276
      %p283 = scmp.eq.s32.totalorder %s21, 3
      %p284 = por %p282, %p283
      %p285 = scmp.ne.s32.totalorder %s277, %s280
      %p286 = scmp.eq.s32.totalorder %s21, 0
      %p287 = por %p285, %p286
      %p288 = scmp.ne.s32.totalorder %s277, %s280
      %p289 = scmp.eq.s32.totalorder %s26, 3
      %p290 = por %p288, %p289
      %p291 = scmp.ne.s32.totalorder %s280, %s281
      %p292 = scmp.eq.s32.totalorder %s26, 0
      %p293 = por %p291, %p292
      %p294 = scmp.ne.s32.totalorder %s280, %s281
      %p295 = scmp.eq.s32.totalorder %s27, 3
      %p296 = por %p294, %p295
      %p298 = scmp.ne.s32.totalorder %s281, %s297
      %p299 = scmp.eq.s32.totalorder %s27, 0
      %p300 = por %p298, %p299
      %s301 = ssub.s32 %s29, %s36
      %p302 = scmp.eq.s32.totalorder %s301, 0
      %s304 = sadd.s32 %s303, 1
      %s305 = scalar_select %p302, %s303, %s304
      %p308 = pneg %p302
      %p309 = scmp.eq.s32.totalorder %s21, 3
      %p310 = por %p308, %p309
      %p311 = scmp.ne.s32.totalorder %s303, %s306
      %p312 = scmp.eq.s32.totalorder %s21, 0
      %p313 = por %p311, %p312
      %p314 = scmp.ne.s32.totalorder %s303, %s306
      %p315 = scmp.eq.s32.totalorder %s26, 3
      %p316 = por %p314, %p315
      %p317 = scmp.ne.s32.totalorder %s306, %s307
      %p318 = scmp.eq.s32.totalorder %s26, 0
      %p319 = por %p317, %p318
      %p320 = scmp.ne.s32.totalorder %s306, %s307
      %p321 = scmp.eq.s32.totalorder %s27, 3
      %p322 = por %p320, %p321
      %p324 = scmp.ne.s32.totalorder %s307, %s323
      %p325 = scmp.eq.s32.totalorder %s27, 0
      %p326 = por %p324, %p325
      %s327 = ssub.s32 %s29, %s36
      %p328 = scmp.eq.s32.totalorder %s327, 0
      %s330 = sadd.s32 %s329, 1
      %s331 = scalar_select %p328, %s329, %s330
      %p334 = pneg %p328
      %p335 = scmp.eq.s32.totalorder %s21, 3
      %p336 = por %p334, %p335
      %p337 = scmp.ne.s32.totalorder %s329, %s332
      %p338 = scmp.eq.s32.totalorder %s21, 0
      %p339 = por %p337, %p338
      %p340 = scmp.ne.s32.totalorder %s329, %s332
      %p341 = scmp.eq.s32.totalorder %s26, 3
      %p342 = por %p340, %p341
      %p343 = scmp.ne.s32.totalorder %s332, %s333
      %p344 = scmp.eq.s32.totalorder %s26, 0
      %p345 = por %p343, %p344
      %p346 = scmp.ne.s32.totalorder %s332, %s333
      %p347 = scmp.eq.s32.totalorder %s27, 3
      %p348 = por %p346, %p347
      %p350 = scmp.ne.s32.totalorder %s333, %s349
      %p351 = scmp.eq.s32.totalorder %s27, 0
      %p352 = por %p350, %p351
      %s353 = ssub.s32 %s28, %s40
      %p354 = scmp.eq.s32.totalorder %s353, 0
      %s356 = sadd.s32 %s355, 1
      %s357 = scalar_select %p354, %s355, %s356
      %p360 = pneg %p354
      %p361 = scmp.eq.s32.totalorder %s21, 3
      %p362 = por %p360, %p361
      %p363 = scmp.ne.s32.totalorder %s355, %s358
      %p364 = scmp.eq.s32.totalorder %s21, 0
      %p365 = por %p363, %p364
      %p366 = scmp.ne.s32.totalorder %s355, %s358
      %p367 = scmp.eq.s32.totalorder %s26, 3
      %p368 = por %p366, %p367
      %p369 = scmp.ne.s32.totalorder %s358, %s359
      %p370 = scmp.eq.s32.totalorder %s26, 0
      %p371 = por %p369, %p370
      %p372 = scmp.ne.s32.totalorder %s358, %s359
      %p373 = scmp.eq.s32.totalorder %s27, 3
      %p374 = por %p372, %p373
      %p376 = scmp.ne.s32.totalorder %s359, %s375
      %p377 = scmp.eq.s32.totalorder %s27, 0
      %p378 = por %p376, %p377
      %p379 = scmp.le.s32.totalorder 1, %s21
      %p380 = scmp.lt.s32.totalorder %s21, 5
      %p381 = pnand %p379, %p380
      %p382 = pneg %p381
      // Predicated region
      $region9: #{tpu_custom_call.1} parent=5 // pred_check
        _
      $region10: #{tpu_custom_call.1} parent=5 // pred_check_branch
        %384 = sbr.rel (%p381) target = $region12
      $region11: #{tpu_custom_call.1} parent=5 // pred_region
        %s385 = ssub.s32 %s21, 1
      $region12: #{tpu_custom_call.1} parent=5 // pred_fallthru
        _
      %p386 = scmp.lt.s32.totalorder %s21, 4
      // Predicated region
      $region13: #{tpu_custom_call.1} parent=5 // pred_check
        %p387 = pneg %p386
      $region14: #{tpu_custom_call.1} parent=5 // pred_check_branch
        %389 = sbr.rel (%p387) target = $region16
      $region15: #{tpu_custom_call.1} parent=5 // pred_region
        // Predicated region
        $region17: #{tpu_custom_call.1} parent=15 // pred_check
          %p390 = pneg %p53
        $region18: #{tpu_custom_call.1} parent=15 // pred_check_branch
          %392 = sbr.rel (%p390) target = $region20
        $region19: #{tpu_custom_call.1} parent=15 // pred_region
          %p393 = scmp.lt.s32.totalorder %s28, 1
          %s394 = scalar_select %p393, %s28, 1
          %s395 = smul.addr %s394, 8
          %s396 = scalar_lea.vmem %s0, %s395
        $region20: #{tpu_custom_call.1} parent=15 // pred_fallthru
          _
        // Predicated region
        $region21: #{tpu_custom_call.1} parent=15 // pred_check
          %p397 = pneg %p79
        $region22: #{tpu_custom_call.1} parent=15 // pred_check_branch
          %399 = sbr.rel (%p397) target = $region24
        $region23: #{tpu_custom_call.1} parent=15 // pred_region
          %p400 = scmp.lt.s32.totalorder %s29, 1
          %s401 = scalar_select %p400, %s29, 1
          %s402 = scalar_lea.vmem %s1, %s401
        $region24: #{tpu_custom_call.1} parent=15 // pred_fallthru
          _
        // Predicated region
        $region25: #{tpu_custom_call.1} parent=15 // pred_check
          %p403 = pneg %p105
        $region26: #{tpu_custom_call.1} parent=15 // pred_check_branch
          %405 = sbr.rel (%p403) target = $region28
        $region27: #{tpu_custom_call.1} parent=15 // pred_region
          %p406 = scmp.lt.s32.totalorder %s29, 1
          %s407 = scalar_select %p406, %s29, 1
          %s408 = scalar_lea.vmem %s2, %s407
        $region28: #{tpu_custom_call.1} parent=15 // pred_fallthru
          _
        // Predicated region
        $region29: #{tpu_custom_call.1} parent=15 // pred_check
          %p409 = pneg %p131
        $region30: #{tpu_custom_call.1} parent=15 // pred_check_branch
          %411 = sbr.rel (%p409) target = $region32
        $region31: #{tpu_custom_call.1} parent=15 // pred_region
          %p412 = scmp.lt.s32.totalorder %s29, 1
          %s413 = scalar_select %p412, %s29, 1
          %s414 = smul.addr %s413, 4
          %s415 = smul.addr %s414, 4
          %s416 = scalar_lea.vmem %s3, %s415
        $region32: #{tpu_custom_call.1} parent=15 // pred_fallthru
          _
        // Predicated region
        $region33: #{tpu_custom_call.1} parent=15 // pred_check
          %p417 = pneg %p157
        $region34: #{tpu_custom_call.1} parent=15 // pred_check_branch
          %419 = sbr.rel (%p417) target = $region36
        $region35: #{tpu_custom_call.1} parent=15 // pred_region
          %p420 = scmp.lt.s32.totalorder %s29, 1
          %s421 = scalar_select %p420, %s29, 1
          %s422 = smul.addr %s421, 4
          %s423 = smul.addr %s422, 4
          %s424 = scalar_lea.vmem %s4, %s423
        $region36: #{tpu_custom_call.1} parent=15 // pred_fallthru
          _
        // Predicated region
        $region37: #{tpu_custom_call.1} parent=15 // pred_check
          %p425 = pneg %p183
        $region38: #{tpu_custom_call.1} parent=15 // pred_check_branch
          %427 = sbr.rel (%p425) target = $region40
        $region39: #{tpu_custom_call.1} parent=15 // pred_region
          %p428 = scmp.lt.s32.totalorder %s29, 1
          %s429 = scalar_select %p428, %s29, 1
          %s430 = scalar_lea.vmem %s5, %s429
        $region40: #{tpu_custom_call.1} parent=15 // pred_fallthru
          _
        // Predicated region
        $region41: #{tpu_custom_call.1} parent=15 // pred_check
          %p431 = pneg %p209
        $region42: #{tpu_custom_call.1} parent=15 // pred_check_branch
          %433 = sbr.rel (%p431) target = $region44
        $region43: #{tpu_custom_call.1} parent=15 // pred_region
          %p434 = scmp.lt.s32.totalorder %s29, 1
          %s435 = scalar_select %p434, %s29, 1
          %s436 = scalar_lea.vmem %s6, %s435
        $region44: #{tpu_custom_call.1} parent=15 // pred_fallthru
          _
        // Predicated region
        $region45: #{tpu_custom_call.1} parent=15 // pred_check
          %p437 = pneg %p235
        $region46: #{tpu_custom_call.1} parent=15 // pred_check_branch
          %439 = sbr.rel (%p437) target = $region48
        $region47: #{tpu_custom_call.1} parent=15 // pred_region
          %p440 = scmp.lt.s32.totalorder %s29, 1
          %s441 = scalar_select %p440, %s29, 1
          %s442 = scalar_lea.vmem %s7, %s441
        $region48: #{tpu_custom_call.1} parent=15 // pred_fallthru
          _
        // Predicated region
        $region49: #{tpu_custom_call.1} parent=15 // pred_check
          %p443 = pneg %p261
        $region50: #{tpu_custom_call.1} parent=15 // pred_check_branch
          %445 = sbr.rel (%p443) target = $region52
        $region51: #{tpu_custom_call.1} parent=15 // pred_region
          %p446 = scmp.lt.s32.totalorder %s29, 1
          %s447 = scalar_select %p446, %s29, 1
          %s448 = smul.addr %s447, 4
          %s449 = smul.addr %s448, 4
          %s450 = scalar_lea.vmem %s8, %s449
        $region52: #{tpu_custom_call.1} parent=15 // pred_fallthru
          _
        // Predicated region
        $region53: #{tpu_custom_call.1} parent=15 // pred_check
          %p451 = pneg %p287
        $region54: #{tpu_custom_call.1} parent=15 // pred_check_branch
          %453 = sbr.rel (%p451) target = $region56
        $region55: #{tpu_custom_call.1} parent=15 // pred_region
          %p454 = scmp.lt.s32.totalorder %s29, 1
          %s455 = scalar_select %p454, %s29, 1
          %s456 = scalar_lea.vmem %s9, %s455
        $region56: #{tpu_custom_call.1} parent=15 // pred_fallthru
          _
        // Predicated region
        $region57: #{tpu_custom_call.1} parent=15 // pred_check
          %p457 = pneg %p313
        $region58: #{tpu_custom_call.1} parent=15 // pred_check_branch
          %459 = sbr.rel (%p457) target = $region60
        $region59: #{tpu_custom_call.1} parent=15 // pred_region
          %p460 = scmp.lt.s32.totalorder %s29, 1
          %s461 = scalar_select %p460, %s29, 1
          %s462 = smul.addr %s461, 16
          %s463 = smul.addr %s462, 4
          %s464 = scalar_lea.vmem %s10, %s463
        $region60: #{tpu_custom_call.1} parent=15 // pred_fallthru
          _
        // Predicated region
        $region61: #{tpu_custom_call.1} parent=15 // pred_check
          %p465 = pneg %p339
        $region62: #{tpu_custom_call.1} parent=15 // pred_check_branch
          %467 = sbr.rel (%p465) target = $region64
        $region63: #{tpu_custom_call.1} parent=15 // pred_region
          %p468 = scmp.lt.s32.totalorder %s29, 1
          %s469 = scalar_select %p468, %s29, 1
          %s470 = scalar_lea.vmem %s11, %s469
        $region64: #{tpu_custom_call.1} parent=15 // pred_fallthru
          _
      $region16: #{tpu_custom_call.1} parent=5 // pred_fallthru
        _
      %p471 = scmp.le.s32.totalorder 1, %s21
      %p472 = scmp.lt.s32.totalorder %s21, 5
      %p473 = pnand %p471, %p472
      %p474 = pneg %p473
      // Predicated region
      $region65: #{tpu_custom_call.1} parent=5 // pred_check
        _
      $region66: #{tpu_custom_call.1} parent=5 // pred_check_branch
        %476 = sbr.rel (%p473) target = $region68
      $region67: #{tpu_custom_call.1} parent=5 // pred_region
        %s477 = ssub.s32 %s21, 1
        %p478 = scmp.lt.s32.totalorder %s30, 1
        %s479 = scalar_select %p478, %s30, 1
        %s480 = smul.addr %s479, 8
        %s481 = scalar_lea.vmem %s0, %s480
        %p482 = pneg %p59
        %p483 = pneg %p56
        %p484 = scmp.lt.s32.totalorder %s31, 1
        %s485 = scalar_select %p484, %s31, 1
        %s486 = scalar_lea.vmem %s1, %s485
        %p487 = pneg %p85
        %p488 = pneg %p82
        %p489 = scmp.lt.s32.totalorder %s31, 1
        %s490 = scalar_select %p489, %s31, 1
        %s491 = scalar_lea.vmem %s2, %s490
        %p492 = pneg %p111
        %p493 = pneg %p108
        %p494 = scmp.lt.s32.totalorder %s31, 1
        %s495 = scalar_select %p494, %s31, 1
        %s496 = smul.addr %s495, 4
        %s497 = smul.addr %s496, 4
        %s498 = scalar_lea.vmem %s3, %s497
        %p499 = pneg %p137
        %p500 = pneg %p134
        %p501 = scmp.lt.s32.totalorder %s31, 1
        %s502 = scalar_select %p501, %s31, 1
        %s503 = smul.addr %s502, 4
        %s504 = smul.addr %s503, 4
        %s505 = scalar_lea.vmem %s4, %s504
        %p506 = pneg %p163
        %p507 = pneg %p160
        %p508 = scmp.lt.s32.totalorder %s31, 1
        %s509 = scalar_select %p508, %s31, 1
        %s510 = scalar_lea.vmem %s5, %s509
        %p511 = pneg %p189
        %p512 = pneg %p186
        %p513 = scmp.lt.s32.totalorder %s31, 1
        %s514 = scalar_select %p513, %s31, 1
        %s515 = scalar_lea.vmem %s6, %s514
        %p516 = pneg %p215
        %p517 = pneg %p212
        %p518 = scmp.lt.s32.totalorder %s31, 1
        %s519 = scalar_select %p518, %s31, 1
        %s520 = scalar_lea.vmem %s7, %s519
        %p521 = pneg %p241
        %p522 = pneg %p238
        %p523 = scmp.lt.s32.totalorder %s31, 1
        %s524 = scalar_select %p523, %s31, 1
        %s525 = smul.addr %s524, 4
        %s526 = smul.addr %s525, 4
        %s527 = scalar_lea.vmem %s8, %s526
        %p528 = pneg %p267
        %p529 = pneg %p264
        %p530 = scmp.lt.s32.totalorder %s31, 1
        %s531 = scalar_select %p530, %s31, 1
        %s532 = scalar_lea.vmem %s9, %s531
        %p533 = pneg %p293
        %p534 = pneg %p290
        %p535 = scmp.lt.s32.totalorder %s31, 1
        %s536 = scalar_select %p535, %s31, 1
        %s537 = smul.addr %s536, 16
        %s538 = smul.addr %s537, 4
        %s539 = scalar_lea.vmem %s10, %s538
        %p540 = pneg %p319
        %p541 = pneg %p316
        %p542 = scmp.lt.s32.totalorder %s31, 1
        %s543 = scalar_select %p542, %s31, 1
        %s544 = scalar_lea.vmem %s11, %s543
        %p545 = pneg %p345
        %p546 = pneg %p342
        %p547 = pneg %p371
        %p548 = pneg %p368
        %s549 = sand.u32 %s358, 1
        %s550 = scalar_lea.sflag [#allocation3], %s549
        %s551 = sand.u32 %s358, 1
        %s552 = smul.addr %s551, 8
        %s553 = scalar_lea.vmem [#allocation2], %s552
        %p554 = scmp.lt.s32.totalorder %s30, 1
        %s555 = scalar_select %p554, %s30, 1
        %s556 = smul.addr %s555, 8
        %s557 = scalar_lea.vmem %s0, %s556
        %p558 = scmp.lt.s32.totalorder %s31, 1
        %s559 = scalar_select %p558, %s31, 1
        %s560 = scalar_lea.vmem %s1, %s559
        %p561 = scmp.lt.s32.totalorder %s31, 1
        %s562 = scalar_select %p561, %s31, 1
        %s563 = scalar_lea.vmem %s2, %s562
        %p564 = scmp.lt.s32.totalorder %s31, 1
        %s565 = scalar_select %p564, %s31, 1
        %s566 = smul.addr %s565, 4
        %s567 = smul.addr %s566, 4
        %s568 = scalar_lea.vmem %s3, %s567
        %p569 = scmp.lt.s32.totalorder %s31, 1
        %s570 = scalar_select %p569, %s31, 1
        %s571 = smul.addr %s570, 4
        %s572 = smul.addr %s571, 4
        %s573 = scalar_lea.vmem %s4, %s572
        %p574 = scmp.lt.s32.totalorder %s31, 1
        %s575 = scalar_select %p574, %s31, 1
        %s576 = scalar_lea.vmem %s5, %s575
        %p577 = scmp.lt.s32.totalorder %s31, 1
        %s578 = scalar_select %p577, %s31, 1
        %s579 = scalar_lea.vmem %s6, %s578
        %p580 = scmp.lt.s32.totalorder %s31, 1
        %s581 = scalar_select %p580, %s31, 1
        %s582 = scalar_lea.vmem %s7, %s581
        %p583 = scmp.lt.s32.totalorder %s31, 1
        %s584 = scalar_select %p583, %s31, 1
        %s585 = smul.addr %s584, 4
        %s586 = smul.addr %s585, 4
        %s587 = scalar_lea.vmem %s8, %s586
        %p588 = scmp.lt.s32.totalorder %s31, 1
        %s589 = scalar_select %p588, %s31, 1
        %s590 = scalar_lea.vmem %s9, %s589
        %p591 = scmp.lt.s32.totalorder %s31, 1
        %s592 = scalar_select %p591, %s31, 1
        %s593 = smul.addr %s592, 16
        %s594 = smul.addr %s593, 4
        %s595 = scalar_lea.vmem %s10, %s594
        %p596 = scmp.lt.s32.totalorder %s31, 1
        %s597 = scalar_select %p596, %s31, 1
        %s598 = scalar_lea.vmem %s11, %s597
        %p600 = scmp.eq.s32.totalorder %s31, 0
        // Predicated region
        $region69: #{tpu_custom_call.1} parent=67 // pred_check
          %p601 = pneg %p600
        $region70: #{tpu_custom_call.1} parent=67 // pred_check_branch
          %603 = sbr.rel (%p601) target = $region72
        $region71: #{tpu_custom_call.1} parent=67 // pred_region
          %v604 = vld [vmem:[%s557] sm:$0xff]
          %vm605 = vcmask 261120
          %606 = vst.msk [vmem:[%s553] sm:$0xff] %vm605, %v604
        $region72: #{tpu_custom_call.1} parent=67 // pred_fallthru
          _
        %v607 = vld [vmem:[%s553] sm:$0xff]
        %v608 = vld [vmem:[%s560] sm:$0x1]
        %v609 = vld [vmem:[%s563] sm:$0x1]
        %vm610 = vcmask 261120
        %v611 = vsel %vm610, %v607, 0.0
        %612 = vadd.xlane.f32.xlu0 %v611
        %v613 = vpop.xlane.xlu0 %612
        %v614 = vrcp.pop 32.0
        %v615 = vmul.f32 %v613, %v614
        %v616 = vsub.f32 %v607, %v615
        %v617 = vmul.f32 %v616, %v616
        %v618 = vsel %vm610, %v617, 0.0
        %619 = vadd.xlane.f32.xlu0 %v618
        %v620 = vpop.xlane.xlu0 %619
        %v621 = vmul.f32 %v620, %v614
        %v622 = vadd.f32 %v621, 1e-05
        %v623 = vrsqrt.pop %v622
        %v624 = vmul.f32 %v616, %v623
        %v626 = vlaneseq
        %v627 = vshrl.u32 %v626, 7
        %v628 = vsub.s32 0, %v627
        %v629 = vrot.slane %v608, %v628
        %v631 = vmul.f32 %v624, %v629
        %v633 = vlaneseq
        %v634 = vshrl.u32 %v633, 7
        %v635 = vsub.s32 0, %v634
        %v636 = vrot.slane %v609, %v635
        %v638 = vadd.f32 %v631, %v636
        %v639 = vpack.c.bf16 %v638, %v638
        %v640 = vld [vmem:[%s568] sm:$0xf]
        %v641 = vld [vmem:[%s568 + $0x4] sm:$0xf]
        %v642 = vld [vmem:[%s568 + $0x8] sm:$0xf]
        %v643 = vld [vmem:[%s568 + $0xc] sm:$0xf]
        %v648 = vunpack.c.l.b16 %v640
        %v649 = vunpack.c.l.b16 %v641
        %v650 = vunpack.c.l.b16 %v642
        %v651 = vunpack.c.l.b16 %v643
        %v652 = vpack.c.b16 %v649, %v648
        %v653 = vpack.c.b16 %v651, %v650
        %v657 = vsel %vm610, %v639, 0
        %659 = vmatprep.subr.bf16.mxu0 0
        %660 = vmatpush1.bf16.msra.mxu0 %v652
        %661 = vmatprep.subr.bf16.mxu0 0
        %662 = vmatpush1.bf16.msra.mxu0 %v653
        %663 = vmatprep.subr.bf16.mxu0 0
        %664 = vmatpush1.bf16.msra.mxu0 0
        %665 = vmatprep.subr.bf16.mxu0 0
        %666 = vmatpush1.bf16.msra.mxu0 0
        %667 = vmatprep.subr.bf16.mxu0 0
        %668 = vmatpush1.bf16.msra.mxu0 0
        %669 = vmatprep.subr.bf16.mxu0 0
        %670 = vmatpush1.bf16.msra.mxu0 0
        %671 = vmatprep.subr.bf16.mxu0 0
        %672 = vmatpush1.bf16.msra.mxu0 0
        %673 = vmatprep.subr.bf16.mxu0 0
        %674 = vmatpush1.bf16.msra.mxu0 0
        %675 = vmatprep.subr.bf16.mxu0 0
        %676 = vmatpush1.bf16.msra.mxu0 0
        %677 = vmatprep.subr.bf16.mxu0 0
        %678 = vmatpush1.bf16.msra.mxu0 0
        %679 = vmatprep.subr.bf16.mxu0 0
        %680 = vmatpush1.bf16.msra.mxu0 0
        %681 = vmatprep.subr.bf16.mxu0 0
        %682 = vmatpush1.bf16.msra.mxu0 0
        %683 = vmatprep.subr.bf16.mxu0 0
        %684 = vmatpush1.bf16.msra.mxu0 0
        %685 = vmatprep.subr.bf16.mxu0 0
        %686 = vmatpush1.bf16.msra.mxu0 0
        %687 = vmatprep.subr.bf16.mxu0 0
        %688 = vmatpush1.bf16.msra.mxu0 0
        %689 = vmatprep.subr.bf16.mxu0 0
        %690 = vmatpush1.bf16.msra.mxu0 0
        %691 = vmatprep.mubr.bf16.mxu0 0
        %692 = vmatmul.mubr.bf16.gmra.mrb[0].mxu0 %v657
        %v693 = vpop.f32.mrb[0].mxu0
        %v694 = vadd.f32 0.0, %v693
        %v695 = vpop.f32.mrb[0].mxu0
        %v696 = vpop.f32.mrb[0].mxu0
        %v697 = vpop.f32.mrb[0].mxu0
        %698 = vdwg.mxu0
        %700 = vrot.lane.b32.xlu0 %v694, 120
        %v701 = vpop.permute.xlu0 %700
        %703 = vrot.lane.b32.xlu0 %v694, 112
        %v704 = vpop.permute.xlu0 %703
        %706 = vrot.lane.b32.xlu0 %v694, 104
        %v707 = vpop.permute.xlu0 %706
        %v709 = vcombine.low %v694, %v704
        %v710 = vcombine.high %v694, %v704
        %v712 = vunpack.c.l.s4 1983009808
        %v713 = vunpack.c.0.s8 %v712
        %v714 = vlaneseq
        %v715 = vshrl.u32 %v714, 7
        %v716 = vsub.s32 %v713, %v715
        %v717 = vrot.slane %v709, %v716
        %v719 = vunpack.c.l.s4 1983009808
        %v720 = vunpack.c.0.s8 %v719
        %v721 = vlaneseq
        %v722 = vshrl.u32 %v721, 7
        %v723 = vsub.s32 %v720, %v722
        %v724 = vrot.slane %v710, %v723
        %v725 = vcombine.low %v701, %v707
        %v726 = vcombine.high %v701, %v707
        %v728 = vunpack.c.l.s4 1983009808
        %v729 = vunpack.c.0.s8 %v728
        %v730 = vlaneseq
        %v731 = vshrl.u32 %v730, 7
        %v732 = vsub.s32 %v729, %v731
        %v733 = vrot.slane %v725, %v732
        %v735 = vunpack.c.l.s4 1983009808
        %v736 = vunpack.c.0.s8 %v735
        %v737 = vlaneseq
        %v738 = vshrl.u32 %v737, 7
        %v739 = vsub.s32 %v736, %v738
        %v740 = vrot.slane %v726, %v739
        %v741 = vcombine.low %v717, %v733
        %v742 = vcombine.high %v717, %v733
        %v744 = vunpack.c.l.s4 1934713408
        %v745 = vunpack.c.0.s8 %v744
        %v746 = vlaneseq
        %v747 = vshrl.u32 %v746, 7
        %v748 = vsub.s32 %v745, %v747
        %v749 = vrot.slane %v741, %v748
        %v751 = vunpack.c.l.s4 1934713408
        %v752 = vunpack.c.0.s8 %v751
        %v753 = vlaneseq
        %v754 = vshrl.u32 %v753, 7
        %v755 = vsub.s32 %v752, %v754
        %v756 = vrot.slane %v742, %v755
        %v757 = vcombine.low %v724, %v740
        %v758 = vcombine.high %v724, %v740
        %v760 = vunpack.c.l.s4 1934713408
        %v761 = vunpack.c.0.s8 %v760
        %v762 = vlaneseq
        %v763 = vshrl.u32 %v762, 7
        %v764 = vsub.s32 %v761, %v763
        %v765 = vrot.slane %v757, %v764
        %v767 = vunpack.c.l.s4 1934713408
        %v768 = vunpack.c.0.s8 %v767
        %v769 = vlaneseq
        %v770 = vshrl.u32 %v769, 7
        %v771 = vsub.s32 %v768, %v770
        %v772 = vrot.slane %v758, %v771
        %v773 = vcombine.high %v749, 0.0
        %v774 = vcombine.high %v756, 0.0
        %v775 = vcombine.high %v765, 0.0
        %v776 = vcombine.high %v772, 0.0
        %777 = vrot.lane.b32.xlu0 %v694, 96
        %v778 = vpop.permute.xlu0 %777
        %779 = vrot.lane.b32.xlu0 %v701, 96
        %v780 = vpop.permute.xlu0 %779
        %781 = vrot.lane.b32.xlu0 %v704, 96
        %v782 = vpop.permute.xlu0 %781
        %783 = vrot.lane.b32.xlu0 %v707, 96
        %v784 = vpop.permute.xlu0 %783
        %v789 = vcombine.low %v778, %v782
        %v790 = vcombine.high %v778, %v782
        %v792 = vunpack.c.l.s4 1983009808
        %v793 = vunpack.c.0.s8 %v792
        %v794 = vlaneseq
        %v795 = vshrl.u32 %v794, 7
        %v796 = vsub.s32 %v793, %v795
        %v797 = vrot.slane %v789, %v796
        %v799 = vunpack.c.l.s4 1983009808
        %v800 = vunpack.c.0.s8 %v799
        %v801 = vlaneseq
        %v802 = vshrl.u32 %v801, 7
        %v803 = vsub.s32 %v800, %v802
        %v804 = vrot.slane %v790, %v803
        %v805 = vcombine.low %v780, %v784
        %v806 = vcombine.high %v780, %v784
        %v808 = vunpack.c.l.s4 1983009808
        %v809 = vunpack.c.0.s8 %v808
        %v810 = vlaneseq
        %v811 = vshrl.u32 %v810, 7
        %v812 = vsub.s32 %v809, %v811
        %v813 = vrot.slane %v805, %v812
        %v815 = vunpack.c.l.s4 1983009808
        %v816 = vunpack.c.0.s8 %v815
        %v817 = vlaneseq
        %v818 = vshrl.u32 %v817, 7
        %v819 = vsub.s32 %v816, %v818
        %v820 = vrot.slane %v806, %v819
        %v821 = vcombine.low %v797, %v813
        %v822 = vcombine.high %v797, %v813
        %v824 = vunpack.c.l.s4 1934713408
        %v825 = vunpack.c.0.s8 %v824
        %v826 = vlaneseq
        %v827 = vshrl.u32 %v826, 7
        %v828 = vsub.s32 %v825, %v827
        %v829 = vrot.slane %v821, %v828
        %v831 = vunpack.c.l.s4 1934713408
        %v832 = vunpack.c.0.s8 %v831
        %v833 = vlaneseq
        %v834 = vshrl.u32 %v833, 7
        %v835 = vsub.s32 %v832, %v834
        %v836 = vrot.slane %v822, %v835
        %v837 = vcombine.low %v804, %v820
        %v838 = vcombine.high %v804, %v820
        %v840 = vunpack.c.l.s4 1934713408
        %v841 = vunpack.c.0.s8 %v840
        %v842 = vlaneseq
        %v843 = vshrl.u32 %v842, 7
        %v844 = vsub.s32 %v841, %v843
        %v845 = vrot.slane %v837, %v844
        %v847 = vunpack.c.l.s4 1934713408
        %v848 = vunpack.c.0.s8 %v847
        %v849 = vlaneseq
        %v850 = vshrl.u32 %v849, 7
        %v851 = vsub.s32 %v848, %v850
        %v852 = vrot.slane %v838, %v851
        %v853 = vcombine.high %v829, 0.0
        %v854 = vcombine.high %v836, 0.0
        %v855 = vcombine.high %v845, 0.0
        %v856 = vcombine.high %v852, 0.0
        %857 = vrot.lane.b32.xlu0 %v694, 64
        %v858 = vpop.permute.xlu0 %857
        %859 = vrot.lane.b32.xlu0 %v701, 64
        %v860 = vpop.permute.xlu0 %859
        %861 = vrot.lane.b32.xlu0 %v704, 64
        %v862 = vpop.permute.xlu0 %861
        %863 = vrot.lane.b32.xlu0 %v707, 64
        %v864 = vpop.permute.xlu0 %863
        %v869 = vcombine.low %v858, %v862
        %v870 = vcombine.high %v858, %v862
        %v872 = vunpack.c.l.s4 1983009808
        %v873 = vunpack.c.0.s8 %v872
        %v874 = vlaneseq
        %v875 = vshrl.u32 %v874, 7
        %v876 = vsub.s32 %v873, %v875
        %v877 = vrot.slane %v869, %v876
        %v879 = vunpack.c.l.s4 1983009808
        %v880 = vunpack.c.0.s8 %v879
        %v881 = vlaneseq
        %v882 = vshrl.u32 %v881, 7
        %v883 = vsub.s32 %v880, %v882
        %v884 = vrot.slane %v870, %v883
        %v885 = vcombine.low %v860, %v864
        %v886 = vcombine.high %v860, %v864
        %v888 = vunpack.c.l.s4 1983009808
        %v889 = vunpack.c.0.s8 %v888
        %v890 = vlaneseq
        %v891 = vshrl.u32 %v890, 7
        %v892 = vsub.s32 %v889, %v891
        %v893 = vrot.slane %v885, %v892
        %v895 = vunpack.c.l.s4 1983009808
        %v896 = vunpack.c.0.s8 %v895
        %v897 = vlaneseq
        %v898 = vshrl.u32 %v897, 7
        %v899 = vsub.s32 %v896, %v898
        %v900 = vrot.slane %v886, %v899
        %v901 = vcombine.low %v877, %v893
        %v902 = vcombine.high %v877, %v893
        %v904 = vunpack.c.l.s4 1934713408
        %v905 = vunpack.c.0.s8 %v904
        %v906 = vlaneseq
        %v907 = vshrl.u32 %v906, 7
        %v908 = vsub.s32 %v905, %v907
        %v909 = vrot.slane %v901, %v908
        %v911 = vunpack.c.l.s4 1934713408
        %v912 = vunpack.c.0.s8 %v911
        %v913 = vlaneseq
        %v914 = vshrl.u32 %v913, 7
        %v915 = vsub.s32 %v912, %v914
        %v916 = vrot.slane %v902, %v915
        %v917 = vcombine.low %v884, %v900
        %v918 = vcombine.high %v884, %v900
        %v920 = vunpack.c.l.s4 1934713408
        %v921 = vunpack.c.0.s8 %v920
        %v922 = vlaneseq
        %v923 = vshrl.u32 %v922, 7
        %v924 = vsub.s32 %v921, %v923
        %v925 = vrot.slane %v917, %v924
        %v927 = vunpack.c.l.s4 1934713408
        %v928 = vunpack.c.0.s8 %v927
        %v929 = vlaneseq
        %v930 = vshrl.u32 %v929, 7
        %v931 = vsub.s32 %v928, %v930
        %v932 = vrot.slane %v918, %v931
        %v933 = vcombine.high %v909, 0.0
        %v934 = vcombine.high %v916, 0.0
        %v935 = vcombine.high %v925, 0.0
        %v936 = vcombine.high %v932, 0.0
        %v937 = vpack.c.bf16 %v749, %v749
        %v938 = vpack.c.bf16 %v773, %v773
        %v939 = vpack.c.bf16 %v756, %v756
        %v940 = vpack.c.bf16 %v774, %v774
        %v941 = vpack.c.bf16 %v765, %v765
        %v942 = vpack.c.bf16 %v775, %v775
        %v943 = vpack.c.bf16 %v772, %v772
        %v944 = vpack.c.bf16 %v776, %v776
        %v945 = vpack.c.bf16 %v829, %v829
        %v946 = vpack.c.bf16 %v853, %v853
        %v947 = vpack.c.bf16 %v836, %v836
        %v948 = vpack.c.bf16 %v854, %v854
        %v949 = vpack.c.bf16 %v845, %v845
        %v950 = vpack.c.bf16 %v855, %v855
        %v951 = vpack.c.bf16 %v852, %v852
        %v952 = vpack.c.bf16 %v856, %v856
        %v953 = vcombine.low %v937, %v941
        %v955 = vunpack.c.l.s4 1983009808
        %v956 = vunpack.c.0.s8 %v955
        %v957 = vlaneseq
        %v958 = vshrl.u32 %v957, 7
        %v959 = vsub.s32 %v956, %v958
        %v960 = vrot.slane %v953, %v959
        %v961 = vcombine.low %v939, %v943
        %v963 = vunpack.c.l.s4 1983009808
        %v964 = vunpack.c.0.s8 %v963
        %v965 = vlaneseq
        %v966 = vshrl.u32 %v965, 7
        %v967 = vsub.s32 %v964, %v966
        %v968 = vrot.slane %v961, %v967
        %v969 = vcombine.low %v960, %v968
        %v971 = vunpack.c.l.s4 1934713408
        %v972 = vunpack.c.0.s8 %v971
        %v973 = vlaneseq
        %v974 = vshrl.u32 %v973, 7
        %v975 = vsub.s32 %v972, %v974
        %v976 = vrot.slane %v969, %v975
        %v977 = vcombine.high %v976, 0
        %v978 = vcombine.low %v938, %v942
        %v980 = vunpack.c.l.s4 1983009808
        %v981 = vunpack.c.0.s8 %v980
        %v982 = vlaneseq
        %v983 = vshrl.u32 %v982, 7
        %v984 = vsub.s32 %v981, %v983
        %v985 = vrot.slane %v978, %v984
        %v986 = vcombine.low %v940, %v944
        %v988 = vunpack.c.l.s4 1983009808
        %v989 = vunpack.c.0.s8 %v988
        %v990 = vlaneseq
        %v991 = vshrl.u32 %v990, 7
        %v992 = vsub.s32 %v989, %v991
        %v993 = vrot.slane %v986, %v992
        %v994 = vcombine.low %v985, %v993
        %v996 = vunpack.c.l.s4 1934713408
        %v997 = vunpack.c.0.s8 %v996
        %v998 = vlaneseq
        %v999 = vshrl.u32 %v998, 7
        %v1000 = vsub.s32 %v997, %v999
        %v1001 = vrot.slane %v994, %v1000
        %v1002 = vcombine.high %v1001, 0
        %v1005 = vpack.i.b16 %v1001, %v976
        %v1006 = vshrl.u32 %v976, 16
        %v1007 = vshrl.u32 %v1001, 16
        %v1008 = vpack.i.b16 %v1007, %v1006
        %v1011 = vpack.i.b16 %v1002, %v977
        %v1012 = vshrl.u32 %v977, 16
        %v1013 = vshrl.u32 %v1002, 16
        %v1014 = vpack.i.b16 %v1013, %v1012
        %1015 = vxpose.xlu0.c.b16.start [1/8] %v945, 128
        %1016 = vxpose.xlu0.c.b16.cont [2/8] 0, 128
        %1017 = vxpose.xlu0.c.b16.cont [3/8] 0, 128
        %1018 = vxpose.xlu0.c.b16.cont [4/8] 0, 128
        %1019 = vxpose.xlu0.c.b16.cont [5/8] 0, 128
        %1020 = vxpose.xlu0.c.b16.cont [6/8] 0, 128
        %1021 = vxpose.xlu0.c.b16.cont [7/8] 0, 128
        %1022 = vxpose.xlu0.c.b16.end [8/8] 0, 128
        %v1023 = vpop.trf.xlu0
        %v1024 = vpop.trf.xlu0
        %v1025 = vpop.trf.xlu0
        %v1026 = vpop.trf.xlu0
        %v1027 = vpop.trf.xlu0
        %v1028 = vpop.trf.xlu0
        %v1029 = vpop.trf.xlu0
        %v1030 = vpop.trf.xlu0
        %1031 = vxpose.xlu0.c.b16.start [1/8] %v946, 128
        %1032 = vxpose.xlu0.c.b16.cont [2/8] 0, 128
        %1033 = vxpose.xlu0.c.b16.cont [3/8] 0, 128
        %1034 = vxpose.xlu0.c.b16.cont [4/8] 0, 128
        %1035 = vxpose.xlu0.c.b16.cont [5/8] 0, 128
        %1036 = vxpose.xlu0.c.b16.cont [6/8] 0, 128
        %1037 = vxpose.xlu0.c.b16.cont [7/8] 0, 128
        %1038 = vxpose.xlu0.c.b16.end [8/8] 0, 128
        %v1039 = vpop.trf.xlu0
        %v1040 = vpop.trf.xlu0
        %v1041 = vpop.trf.xlu0
        %v1042 = vpop.trf.xlu0
        %v1043 = vpop.trf.xlu0
        %v1044 = vpop.trf.xlu0
        %v1045 = vpop.trf.xlu0
        %v1046 = vpop.trf.xlu0
        %1047 = vxpose.xlu0.c.b16.start [1/8] %v947, 128
        %1048 = vxpose.xlu0.c.b16.cont [2/8] 0, 128
        %1049 = vxpose.xlu0.c.b16.cont [3/8] 0, 128
        %1050 = vxpose.xlu0.c.b16.cont [4/8] 0, 128
        %1051 = vxpose.xlu0.c.b16.cont [5/8] 0, 128
        %1052 = vxpose.xlu0.c.b16.cont [6/8] 0, 128
        %1053 = vxpose.xlu0.c.b16.cont [7/8] 0, 128
        %1054 = vxpose.xlu0.c.b16.end [8/8] 0, 128
        %v1055 = vpop.trf.xlu0
        %v1056 = vpop.trf.xlu0
        %v1057 = vpop.trf.xlu0
        %v1058 = vpop.trf.xlu0
        %v1059 = vpop.trf.xlu0
        %v1060 = vpop.trf.xlu0
        %v1061 = vpop.trf.xlu0
        %v1062 = vpop.trf.xlu0
        %1063 = vxpose.xlu0.c.b16.start [1/8] %v948, 128
        %1064 = vxpose.xlu0.c.b16.cont [2/8] 0, 128
        %1065 = vxpose.xlu0.c.b16.cont [3/8] 0, 128
        %1066 = vxpose.xlu0.c.b16.cont [4/8] 0, 128
        %1067 = vxpose.xlu0.c.b16.cont [5/8] 0, 128
        %1068 = vxpose.xlu0.c.b16.cont [6/8] 0, 128
        %1069 = vxpose.xlu0.c.b16.cont [7/8] 0, 128
        %1070 = vxpose.xlu0.c.b16.end [8/8] 0, 128
        %v1071 = vpop.trf.xlu0
        %v1072 = vpop.trf.xlu0
        %v1073 = vpop.trf.xlu0
        %v1074 = vpop.trf.xlu0
        %v1075 = vpop.trf.xlu0
        %v1076 = vpop.trf.xlu0
        %v1077 = vpop.trf.xlu0
        %v1078 = vpop.trf.xlu0
        %1079 = vxpose.xlu0.c.b16.start [1/8] %v949, 128
        %1080 = vxpose.xlu0.c.b16.cont [2/8] 0, 128
        %1081 = vxpose.xlu0.c.b16.cont [3/8] 0, 128
        %1082 = vxpose.xlu0.c.b16.cont [4/8] 0, 128
        %1083 = vxpose.xlu0.c.b16.cont [5/8] 0, 128
        %1084 = vxpose.xlu0.c.b16.cont [6/8] 0, 128
        %1085 = vxpose.xlu0.c.b16.cont [7/8] 0, 128
        %1086 = vxpose.xlu0.c.b16.end [8/8] 0, 128
        %v1087 = vpop.trf.xlu0
        %v1088 = vpop.trf.xlu0
        %v1089 = vpop.trf.xlu0
        %v1090 = vpop.trf.xlu0
        %v1091 = vpop.trf.xlu0
        %v1092 = vpop.trf.xlu0
        %v1093 = vpop.trf.xlu0
        %v1094 = vpop.trf.xlu0
        %1095 = vxpose.xlu0.c.b16.start [1/8] %v950, 128
        %1096 = vxpose.xlu0.c.b16.cont [2/8] 0, 128
        %1097 = vxpose.xlu0.c.b16.cont [3/8] 0, 128
        %1098 = vxpose.xlu0.c.b16.cont [4/8] 0, 128
        %1099 = vxpose.xlu0.c.b16.cont [5/8] 0, 128
        %1100 = vxpose.xlu0.c.b16.cont [6/8] 0, 128
        %1101 = vxpose.xlu0.c.b16.cont [7/8] 0, 128
        %1102 = vxpose.xlu0.c.b16.end [8/8] 0, 128
        %v1103 = vpop.trf.xlu0
        %v1104 = vpop.trf.xlu0
        %v1105 = vpop.trf.xlu0
        %v1106 = vpop.trf.xlu0
        %v1107 = vpop.trf.xlu0
        %v1108 = vpop.trf.xlu0
        %v1109 = vpop.trf.xlu0
        %v1110 = vpop.trf.xlu0
        %1111 = vxpose.xlu0.c.b16.start [1/8] %v951, 128
        %1112 = vxpose.xlu0.c.b16.cont [2/8] 0, 128
        %1113 = vxpose.xlu0.c.b16.cont [3/8] 0, 128
        %1114 = vxpose.xlu0.c.b16.cont [4/8] 0, 128
        %1115 = vxpose.xlu0.c.b16.cont [5/8] 0, 128
        %1116 = vxpose.xlu0.c.b16.cont [6/8] 0, 128
        %1117 = vxpose.xlu0.c.b16.cont [7/8] 0, 128
        %1118 = vxpose.xlu0.c.b16.end [8/8] 0, 128
        %v1119 = vpop.trf.xlu0
        %v1120 = vpop.trf.xlu0
        %v1121 = vpop.trf.xlu0
        %v1122 = vpop.trf.xlu0
        %v1123 = vpop.trf.xlu0
        %v1124 = vpop.trf.xlu0
        %v1125 = vpop.trf.xlu0
        %v1126 = vpop.trf.xlu0
        %1127 = vxpose.xlu0.c.b16.start [1/8] %v952, 128
        %1128 = vxpose.xlu0.c.b16.cont [2/8] 0, 128
        %1129 = vxpose.xlu0.c.b16.cont [3/8] 0, 128
        %1130 = vxpose.xlu0.c.b16.cont [4/8] 0, 128
        %1131 = vxpose.xlu0.c.b16.cont [5/8] 0, 128
        %1132 = vxpose.xlu0.c.b16.cont [6/8] 0, 128
        %1133 = vxpose.xlu0.c.b16.cont [7/8] 0, 128
        %1134 = vxpose.xlu0.c.b16.end [8/8] 0, 128
        %v1135 = vpop.trf.xlu0
        %v1136 = vpop.trf.xlu0
        %v1137 = vpop.trf.xlu0
        %v1138 = vpop.trf.xlu0
        %v1139 = vpop.trf.xlu0
        %v1140 = vpop.trf.xlu0
        %v1141 = vpop.trf.xlu0
        %v1142 = vpop.trf.xlu0
        %v1143 = vcombine.low %v1023, %v1087
        %v1145 = vunpack.c.l.s4 1983009808
        %v1146 = vunpack.c.0.s8 %v1145
        %v1147 = vlaneseq
        %v1148 = vshrl.u32 %v1147, 7
        %v1149 = vsub.s32 %v1146, %v1148
        %v1150 = vrot.slane %v1143, %v1149
        %v1151 = vcombine.low %v1055, %v1119
        %v1153 = vunpack.c.l.s4 1983009808
        %v1154 = vunpack.c.0.s8 %v1153
        %v1155 = vlaneseq
        %v1156 = vshrl.u32 %v1155, 7
        %v1157 = vsub.s32 %v1154, %v1156
        %v1158 = vrot.slane %v1151, %v1157
        %v1159 = vcombine.low %v1150, %v1158
        %v1160 = vcombine.high %v1150, %v1158
        %v1162 = vunpack.c.l.s4 1934713408
        %v1163 = vunpack.c.0.s8 %v1162
        %v1164 = vlaneseq
        %v1165 = vshrl.u32 %v1164, 7
        %v1166 = vsub.s32 %v1163, %v1165
        %v1167 = vrot.slane %v1159, %v1166
        %v1169 = vunpack.c.l.s4 1934713408
        %v1170 = vunpack.c.0.s8 %v1169
        %v1171 = vlaneseq
        %v1172 = vshrl.u32 %v1171, 7
        %v1173 = vsub.s32 %v1170, %v1172
        %v1174 = vrot.slane %v1160, %v1173
        %v1175 = vcombine.high %v1167, 0
        %v1176 = vcombine.high %v1174, 0
        %v1177 = vcombine.low %v1039, %v1103
        %v1179 = vunpack.c.l.s4 1983009808
        %v1180 = vunpack.c.0.s8 %v1179
        %v1181 = vlaneseq
        %v1182 = vshrl.u32 %v1181, 7
        %v1183 = vsub.s32 %v1180, %v1182
        %v1184 = vrot.slane %v1177, %v1183
        %v1185 = vcombine.low %v1071, %v1135
        %v1187 = vunpack.c.l.s4 1983009808
        %v1188 = vunpack.c.0.s8 %v1187
        %v1189 = vlaneseq
        %v1190 = vshrl.u32 %v1189, 7
        %v1191 = vsub.s32 %v1188, %v1190
        %v1192 = vrot.slane %v1185, %v1191
        %v1193 = vcombine.low %v1184, %v1192
        %v1194 = vcombine.high %v1184, %v1192
        %v1196 = vunpack.c.l.s4 1934713408
        %v1197 = vunpack.c.0.s8 %v1196
        %v1198 = vlaneseq
        %v1199 = vshrl.u32 %v1198, 7
        %v1200 = vsub.s32 %v1197, %v1199
        %v1201 = vrot.slane %v1193, %v1200
        %v1203 = vunpack.c.l.s4 1934713408
        %v1204 = vunpack.c.0.s8 %v1203
        %v1205 = vlaneseq
        %v1206 = vshrl.u32 %v1205, 7
        %v1207 = vsub.s32 %v1204, %v1206
        %v1208 = vrot.slane %v1194, %v1207
        %v1209 = vcombine.high %v1201, 0
        %v1210 = vcombine.high %v1208, 0
        %v1213 = vpack.i.b16 %v1201, %v1167
        %v1215 = vshrl.u32 %v1167, 16
        %v1216 = vshrl.u32 %v1201, 16
        %v1217 = vpack.i.b16 %v1216, %v1215
        %v1221 = vpack.i.b16 %v1209, %v1175
        %v1223 = vshrl.u32 %v1175, 16
        %v1224 = vshrl.u32 %v1209, 16
        %v1225 = vpack.i.b16 %v1224, %v1223
        %v1229 = vpack.i.b16 %v1208, %v1174
        %v1231 = vshrl.u32 %v1174, 16
        %v1232 = vshrl.u32 %v1208, 16
        %v1233 = vpack.i.b16 %v1232, %v1231
        %v1237 = vpack.i.b16 %v1210, %v1176
        %v1239 = vshrl.u32 %v1176, 16
        %v1240 = vshrl.u32 %v1210, 16
        %v1241 = vpack.i.b16 %v1240, %v1239
        %1243 = vxpose.xlu0.c.b16.start [1/8] %v1213, 128
        %1244 = vxpose.xlu0.c.b16.cont [2/8] 0, 128
        %1245 = vxpose.xlu0.c.b16.cont [3/8] 0, 128
        %1246 = vxpose.xlu0.c.b16.cont [4/8] 0, 128
        %1247 = vxpose.xlu0.c.b16.cont [5/8] 0, 128
        %1248 = vxpose.xlu0.c.b16.cont [6/8] 0, 128
        %1249 = vxpose.xlu0.c.b16.cont [7/8] 0, 128
        %1250 = vxpose.xlu0.c.b16.end [8/8] 0, 128
        %v1251 = vpop.trf.xlu0
        %v1252 = vpop.trf.xlu0
        %v1253 = vpop.trf.xlu0
        %v1254 = vpop.trf.xlu0
        %v1255 = vpop.trf.xlu0
        %v1256 = vpop.trf.xlu0
        %v1257 = vpop.trf.xlu0
        %v1258 = vpop.trf.xlu0
        %1259 = vxpose.xlu0.c.b16.start [1/8] %v1217, 128
        %1260 = vxpose.xlu0.c.b16.cont [2/8] 0, 128
        %1261 = vxpose.xlu0.c.b16.cont [3/8] 0, 128
        %1262 = vxpose.xlu0.c.b16.cont [4/8] 0, 128
        %1263 = vxpose.xlu0.c.b16.cont [5/8] 0, 128
        %1264 = vxpose.xlu0.c.b16.cont [6/8] 0, 128
        %1265 = vxpose.xlu0.c.b16.cont [7/8] 0, 128
        %1266 = vxpose.xlu0.c.b16.end [8/8] 0, 128
        %v1267 = vpop.trf.xlu0
        %v1268 = vpop.trf.xlu0
        %v1269 = vpop.trf.xlu0
        %v1270 = vpop.trf.xlu0
        %v1271 = vpop.trf.xlu0
        %v1272 = vpop.trf.xlu0
        %v1273 = vpop.trf.xlu0
        %v1274 = vpop.trf.xlu0
        %1275 = vxpose.xlu0.c.b16.start [1/8] %v1221, 128
        %1276 = vxpose.xlu0.c.b16.cont [2/8] 0, 128
        %1277 = vxpose.xlu0.c.b16.cont [3/8] 0, 128
        %1278 = vxpose.xlu0.c.b16.cont [4/8] 0, 128
        %1279 = vxpose.xlu0.c.b16.cont [5/8] 0, 128
        %1280 = vxpose.xlu0.c.b16.cont [6/8] 0, 128
        %1281 = vxpose.xlu0.c.b16.cont [7/8] 0, 128
        %1282 = vxpose.xlu0.c.b16.end [8/8] 0, 128
        %v1283 = vpop.trf.xlu0
        %v1284 = vpop.trf.xlu0
        %v1285 = vpop.trf.xlu0
        %v1286 = vpop.trf.xlu0
        %v1287 = vpop.trf.xlu0
        %v1288 = vpop.trf.xlu0
        %v1289 = vpop.trf.xlu0
        %v1290 = vpop.trf.xlu0
        %1291 = vxpose.xlu0.c.b16.start [1/8] %v1225, 128
        %1292 = vxpose.xlu0.c.b16.cont [2/8] 0, 128
        %1293 = vxpose.xlu0.c.b16.cont [3/8] 0, 128
        %1294 = vxpose.xlu0.c.b16.cont [4/8] 0, 128
        %1295 = vxpose.xlu0.c.b16.cont [5/8] 0, 128
        %1296 = vxpose.xlu0.c.b16.cont [6/8] 0, 128
        %1297 = vxpose.xlu0.c.b16.cont [7/8] 0, 128
        %1298 = vxpose.xlu0.c.b16.end [8/8] 0, 128
        %v1299 = vpop.trf.xlu0
        %v1300 = vpop.trf.xlu0
        %v1301 = vpop.trf.xlu0
        %v1302 = vpop.trf.xlu0
        %v1303 = vpop.trf.xlu0
        %v1304 = vpop.trf.xlu0
        %v1305 = vpop.trf.xlu0
        %v1306 = vpop.trf.xlu0
        %1307 = vxpose.xlu0.c.b16.start [1/8] %v1229, 128
        %1308 = vxpose.xlu0.c.b16.cont [2/8] 0, 128
        %1309 = vxpose.xlu0.c.b16.cont [3/8] 0, 128
        %1310 = vxpose.xlu0.c.b16.cont [4/8] 0, 128
        %1311 = vxpose.xlu0.c.b16.cont [5/8] 0, 128
        %1312 = vxpose.xlu0.c.b16.cont [6/8] 0, 128
        %1313 = vxpose.xlu0.c.b16.cont [7/8] 0, 128
        %1314 = vxpose.xlu0.c.b16.end [8/8] 0, 128
        %v1315 = vpop.trf.xlu0
        %v1316 = vpop.trf.xlu0
        %v1317 = vpop.trf.xlu0
        %v1318 = vpop.trf.xlu0
        %v1319 = vpop.trf.xlu0
        %v1320 = vpop.trf.xlu0
        %v1321 = vpop.trf.xlu0
        %v1322 = vpop.trf.xlu0
        %1323 = vxpose.xlu0.c.b16.start [1/8] %v1233, 128
        %1324 = vxpose.xlu0.c.b16.cont [2/8] 0, 128
        %1325 = vxpose.xlu0.c.b16.cont [3/8] 0, 128
        %1326 = vxpose.xlu0.c.b16.cont [4/8] 0, 128
        %1327 = vxpose.xlu0.c.b16.cont [5/8] 0, 128
        %1328 = vxpose.xlu0.c.b16.cont [6/8] 0, 128
        %1329 = vxpose.xlu0.c.b16.cont [7/8] 0, 128
        %1330 = vxpose.xlu0.c.b16.end [8/8] 0, 128
        %v1331 = vpop.trf.xlu0
        %v1332 = vpop.trf.xlu0
        %v1333 = vpop.trf.xlu0
        %v1334 = vpop.trf.xlu0
        %v1335 = vpop.trf.xlu0
        %v1336 = vpop.trf.xlu0
        %v1337 = vpop.trf.xlu0
        %v1338 = vpop.trf.xlu0
        %1339 = vxpose.xlu0.c.b16.start [1/8] %v1237, 128
        %1340 = vxpose.xlu0.c.b16.cont [2/8] 0, 128
        %1341 = vxpose.xlu0.c.b16.cont [3/8] 0, 128
        %1342 = vxpose.xlu0.c.b16.cont [4/8] 0, 128
        %1343 = vxpose.xlu0.c.b16.cont [5/8] 0, 128
        %1344 = vxpose.xlu0.c.b16.cont [6/8] 0, 128
        %1345 = vxpose.xlu0.c.b16.cont [7/8] 0, 128
        %1346 = vxpose.xlu0.c.b16.end [8/8] 0, 128
        %v1347 = vpop.trf.xlu0
        %v1348 = vpop.trf.xlu0
        %v1349 = vpop.trf.xlu0
        %v1350 = vpop.trf.xlu0
        %v1351 = vpop.trf.xlu0
        %v1352 = vpop.trf.xlu0
        %v1353 = vpop.trf.xlu0
        %v1354 = vpop.trf.xlu0
        %1355 = vxpose.xlu0.c.b16.start [1/8] %v1241, 128
        %1356 = vxpose.xlu0.c.b16.cont [2/8] 0, 128
        %1357 = vxpose.xlu0.c.b16.cont [3/8] 0, 128
        %1358 = vxpose.xlu0.c.b16.cont [4/8] 0, 128
        %1359 = vxpose.xlu0.c.b16.cont [5/8] 0, 128
        %1360 = vxpose.xlu0.c.b16.cont [6/8] 0, 128
        %1361 = vxpose.xlu0.c.b16.cont [7/8] 0, 128
        %1362 = vxpose.xlu0.c.b16.end [8/8] 0, 128
        %v1363 = vpop.trf.xlu0
        %v1364 = vpop.trf.xlu0
        %v1365 = vpop.trf.xlu0
        %v1366 = vpop.trf.xlu0
        %v1367 = vpop.trf.xlu0
        %v1368 = vpop.trf.xlu0
        %v1369 = vpop.trf.xlu0
        %v1370 = vpop.trf.xlu0
        %v1371 = vcombine.low %v1251, %v1315
        %v1373 = vunpack.c.l.s4 1983009808
        %v1374 = vunpack.c.0.s8 %v1373
        %v1375 = vlaneseq
        %v1376 = vshrl.u32 %v1375, 7
        %v1377 = vsub.s32 %v1374, %v1376
        %v1378 = vrot.slane %v1371, %v1377
        %v1379 = vcombine.low %v1283, %v1347
        %v1381 = vunpack.c.l.s4 1983009808
        %v1382 = vunpack.c.0.s8 %v1381
        %v1383 = vlaneseq
        %v1384 = vshrl.u32 %v1383, 7
        %v1385 = vsub.s32 %v1382, %v1384
        %v1386 = vrot.slane %v1379, %v1385
        %v1387 = vcombine.low %v1378, %v1386
        %v1389 = vunpack.c.l.s4 1934713408
        %v1390 = vunpack.c.0.s8 %v1389
        %v1391 = vlaneseq
        %v1392 = vshrl.u32 %v1391, 7
        %v1393 = vsub.s32 %v1390, %v1392
        %v1394 = vrot.slane %v1387, %v1393
        %v1395 = vcombine.high %v1394, 0
        %v1396 = vcombine.low %v1267, %v1331
        %v1398 = vunpack.c.l.s4 1983009808
        %v1399 = vunpack.c.0.s8 %v1398
        %v1400 = vlaneseq
        %v1401 = vshrl.u32 %v1400, 7
        %v1402 = vsub.s32 %v1399, %v1401
        %v1403 = vrot.slane %v1396, %v1402
        %v1404 = vcombine.low %v1299, %v1363
        %v1406 = vunpack.c.l.s4 1983009808
        %v1407 = vunpack.c.0.s8 %v1406
        %v1408 = vlaneseq
        %v1409 = vshrl.u32 %v1408, 7
        %v1410 = vsub.s32 %v1407, %v1409
        %v1411 = vrot.slane %v1404, %v1410
        %v1412 = vcombine.low %v1403, %v1411
        %v1414 = vunpack.c.l.s4 1934713408
        %v1415 = vunpack.c.0.s8 %v1414
        %v1416 = vlaneseq
        %v1417 = vshrl.u32 %v1416, 7
        %v1418 = vsub.s32 %v1415, %v1417
        %v1419 = vrot.slane %v1412, %v1418
        %v1420 = vcombine.high %v1419, 0
        %v1423 = vpack.i.b16 %v1419, %v1394
        %v1424 = vshrl.u32 %v1394, 16
        %v1425 = vshrl.u32 %v1419, 16
        %v1426 = vpack.i.b16 %v1425, %v1424
        %v1429 = vpack.i.b16 %v1420, %v1395
        %v1430 = vshrl.u32 %v1395, 16
        %v1431 = vshrl.u32 %v1420, 16
        %v1432 = vpack.i.b16 %v1431, %v1430
        %vm1433 = vcmask 64512
        %v1435 = vsel %vm1433, %v1005, 0
        %vm1437 = vcmask 1043456
        %v1439 = vsel %vm1437, %v1423, 0
        %1441 = vmatprep.subr.bf16.mxu0 0
        %1442 = vmatpush1.bf16.msra.mxu0 %v1439
        %1443 = vmatprep.subr.bf16.mxu0 0
        %1444 = vmatpush1.bf16.msra.mxu0 0
        %1445 = vmatprep.subr.bf16.mxu0 0
        %1446 = vmatpush1.bf16.msra.mxu0 0
        %1447 = vmatprep.subr.bf16.mxu0 0
        %1448 = vmatpush1.bf16.msra.mxu0 0
        %1449 = vmatprep.subr.bf16.mxu0 0
        %1450 = vmatpush1.bf16.msra.mxu0 0
        %1451 = vmatprep.subr.bf16.mxu0 0
        %1452 = vmatpush1.bf16.msra.mxu0 0
        %1453 = vmatprep.subr.bf16.mxu0 0
        %1454 = vmatpush1.bf16.msra.mxu0 0
        %1455 = vmatprep.subr.bf16.mxu0 0
        %1456 = vmatpush1.bf16.msra.mxu0 0
        %1457 = vmatprep.subr.bf16.mxu0 0
        %1458 = vmatpush1.bf16.msra.mxu0 0
        %1459 = vmatprep.subr.bf16.mxu0 0
        %1460 = vmatpush1.bf16.msra.mxu0 0
        %1461 = vmatprep.subr.bf16.mxu0 0
        %1462 = vmatpush1.bf16.msra.mxu0 0
        %1463 = vmatprep.subr.bf16.mxu0 0
        %1464 = vmatpush1.bf16.msra.mxu0 0
        %1465 = vmatprep.subr.bf16.mxu0 0
        %1466 = vmatpush1.bf16.msra.mxu0 0
        %1467 = vmatprep.subr.bf16.mxu0 0
        %1468 = vmatpush1.bf16.msra.mxu0 0
        %1469 = vmatprep.subr.bf16.mxu0 0
        %1470 = vmatpush1.bf16.msra.mxu0 0
        %1471 = vmatprep.subr.bf16.mxu0 0
        %1472 = vmatpush1.bf16.msra.mxu0 0
        %1473 = vmatprep.mubr.bf16.mxu0 0
        %1474 = vmatmul.mubr.bf16.gmra.mrb[0].mxu0 %v1435
        %v1475 = vpop.f32.mrb[0].mxu0
        %v1476 = vadd.f32 0.0, %v1475
        %v1477 = vpop.f32.mrb[0].mxu0
        %v1478 = vpop.f32.mrb[0].mxu0
        %v1479 = vpop.f32.mrb[0].mxu0
        %1480 = vdwg.mxu0
        %v1482 = vsel %vm1433, %v1008, 0
        %v1485 = vsel %vm1437, %v1426, 0
        %1487 = vmatprep.subr.bf16.mxu0 0
        %1488 = vmatpush1.bf16.msra.mxu0 %v1485
        %1489 = vmatprep.subr.bf16.mxu0 0
        %1490 = vmatpush1.bf16.msra.mxu0 0
        %1491 = vmatprep.subr.bf16.mxu0 0
        %1492 = vmatpush1.bf16.msra.mxu0 0
        %1493 = vmatprep.subr.bf16.mxu0 0
        %1494 = vmatpush1.bf16.msra.mxu0 0
        %1495 = vmatprep.subr.bf16.mxu0 0
        %1496 = vmatpush1.bf16.msra.mxu0 0
        %1497 = vmatprep.subr.bf16.mxu0 0
        %1498 = vmatpush1.bf16.msra.mxu0 0
        %1499 = vmatprep.subr.bf16.mxu0 0
        %1500 = vmatpush1.bf16.msra.mxu0 0
        %1501 = vmatprep.subr.bf16.mxu0 0
        %1502 = vmatpush1.bf16.msra.mxu0 0
        %1503 = vmatprep.subr.bf16.mxu0 0
        %1504 = vmatpush1.bf16.msra.mxu0 0
        %1505 = vmatprep.subr.bf16.mxu0 0
        %1506 = vmatpush1.bf16.msra.mxu0 0
        %1507 = vmatprep.subr.bf16.mxu0 0
        %1508 = vmatpush1.bf16.msra.mxu0 0
        %1509 = vmatprep.subr.bf16.mxu0 0
        %1510 = vmatpush1.bf16.msra.mxu0 0
        %1511 = vmatprep.subr.bf16.mxu0 0
        %1512 = vmatpush1.bf16.msra.mxu0 0
        %1513 = vmatprep.subr.bf16.mxu0 0
        %1514 = vmatpush1.bf16.msra.mxu0 0
        %1515 = vmatprep.subr.bf16.mxu0 0
        %1516 = vmatpush1.bf16.msra.mxu0 0
        %1517 = vmatprep.subr.bf16.mxu0 0
        %1518 = vmatpush1.bf16.msra.mxu0 0
        %1519 = vmatprep.mubr.bf16.mxu0 0
        %1520 = vmatmul.mubr.bf16.gmra.mrb[0].mxu0 %v1482
        %v1521 = vpop.f32.mrb[0].mxu0
        %v1522 = vadd.f32 0.0, %v1521
        %v1523 = vpop.f32.mrb[0].mxu0
        %v1524 = vpop.f32.mrb[0].mxu0
        %v1525 = vpop.f32.mrb[0].mxu0
        %1526 = vdwg.mxu0
        %v1528 = vsel %vm1433, %v1011, 0
        %v1531 = vsel %vm1437, %v1429, 0
        %1533 = vmatprep.subr.bf16.mxu0 0
        %1534 = vmatpush1.bf16.msra.mxu0 %v1531
        %1535 = vmatprep.subr.bf16.mxu0 0
        %1536 = vmatpush1.bf16.msra.mxu0 0
        %1537 = vmatprep.subr.bf16.mxu0 0
        %1538 = vmatpush1.bf16.msra.mxu0 0
        %1539 = vmatprep.subr.bf16.mxu0 0
        %1540 = vmatpush1.bf16.msra.mxu0 0
        %1541 = vmatprep.subr.bf16.mxu0 0
        %1542 = vmatpush1.bf16.msra.mxu0 0
        %1543 = vmatprep.subr.bf16.mxu0 0
        %1544 = vmatpush1.bf16.msra.mxu0 0
        %1545 = vmatprep.subr.bf16.mxu0 0
        %1546 = vmatpush1.bf16.msra.mxu0 0
        %1547 = vmatprep.subr.bf16.mxu0 0
        %1548 = vmatpush1.bf16.msra.mxu0 0
        %1549 = vmatprep.subr.bf16.mxu0 0
        %1550 = vmatpush1.bf16.msra.mxu0 0
        %1551 = vmatprep.subr.bf16.mxu0 0
        %1552 = vmatpush1.bf16.msra.mxu0 0
        %1553 = vmatprep.subr.bf16.mxu0 0
        %1554 = vmatpush1.bf16.msra.mxu0 0
        %1555 = vmatprep.subr.bf16.mxu0 0
        %1556 = vmatpush1.bf16.msra.mxu0 0
        %1557 = vmatprep.subr.bf16.mxu0 0
        %1558 = vmatpush1.bf16.msra.mxu0 0
        %1559 = vmatprep.subr.bf16.mxu0 0
        %1560 = vmatpush1.bf16.msra.mxu0 0
        %1561 = vmatprep.subr.bf16.mxu0 0
        %1562 = vmatpush1.bf16.msra.mxu0 0
        %1563 = vmatprep.subr.bf16.mxu0 0
        %1564 = vmatpush1.bf16.msra.mxu0 0
        %1565 = vmatprep.mubr.bf16.mxu0 0
        %1566 = vmatmul.mubr.bf16.gmra.mrb[0].mxu0 %v1528
        %v1567 = vpop.f32.mrb[0].mxu0
        %v1568 = vadd.f32 0.0, %v1567
        %v1569 = vpop.f32.mrb[0].mxu0
        %v1570 = vpop.f32.mrb[0].mxu0
        %v1571 = vpop.f32.mrb[0].mxu0
        %1572 = vdwg.mxu0
        %v1574 = vsel %vm1433, %v1014, 0
        %v1577 = vsel %vm1437, %v1432, 0
        %1579 = vmatprep.subr.bf16.mxu0 0
        %1580 = vmatpush1.bf16.msra.mxu0 %v1577
        %1581 = vmatprep.subr.bf16.mxu0 0
        %1582 = vmatpush1.bf16.msra.mxu0 0
        %1583 = vmatprep.subr.bf16.mxu0 0
        %1584 = vmatpush1.bf16.msra.mxu0 0
        %1585 = vmatprep.subr.bf16.mxu0 0
        %1586 = vmatpush1.bf16.msra.mxu0 0
        %1587 = vmatprep.subr.bf16.mxu0 0
        %1588 = vmatpush1.bf16.msra.mxu0 0
        %1589 = vmatprep.subr.bf16.mxu0 0
        %1590 = vmatpush1.bf16.msra.mxu0 0
        %1591 = vmatprep.subr.bf16.mxu0 0
        %1592 = vmatpush1.bf16.msra.mxu0 0
        %1593 = vmatprep.subr.bf16.mxu0 0
        %1594 = vmatpush1.bf16.msra.mxu0 0
        %1595 = vmatprep.subr.bf16.mxu0 0
        %1596 = vmatpush1.bf16.msra.mxu0 0
        %1597 = vmatprep.subr.bf16.mxu0 0
        %1598 = vmatpush1.bf16.msra.mxu0 0
        %1599 = vmatprep.subr.bf16.mxu0 0
        %1600 = vmatpush1.bf16.msra.mxu0 0
        %1601 = vmatprep.subr.bf16.mxu0 0
        %1602 = vmatpush1.bf16.msra.mxu0 0
        %1603 = vmatprep.subr.bf16.mxu0 0
        %1604 = vmatpush1.bf16.msra.mxu0 0
        %1605 = vmatprep.subr.bf16.mxu0 0
        %1606 = vmatpush1.bf16.msra.mxu0 0
        %1607 = vmatprep.subr.bf16.mxu0 0
        %1608 = vmatpush1.bf16.msra.mxu0 0
        %1609 = vmatprep.subr.bf16.mxu0 0
        %1610 = vmatpush1.bf16.msra.mxu0 0
        %1611 = vmatprep.mubr.bf16.mxu0 0
        %1612 = vmatmul.mubr.bf16.gmra.mrb[0].mxu0 %v1574
        %v1613 = vpop.f32.mrb[0].mxu0
        %v1614 = vadd.f32 0.0, %v1613
        %v1615 = vpop.f32.mrb[0].mxu0
        %v1616 = vpop.f32.mrb[0].mxu0
        %v1617 = vpop.f32.mrb[0].mxu0
        %1618 = vdwg.mxu0
        %v1619 = vmul.f32 %v1476, 0.35355338
        %v1620 = vmul.f32 %v1522, 0.35355338
        %v1621 = vmul.f32 %v1568, 0.35355338
        %v1622 = vmul.f32 %v1614, 0.35355338
        %v1623 = vlaneseq
        %v1624 = vshrl.u32 %v1623, 7
        %v1625 = vlaneseq
        %v1626 = vand.u32 %v1625, 127
        %vm1627 = vcmp.ge.s32.totalorder %v1624, %v1626
        %v1628 = vsel %vm1627, 1, 0
        %vm1629 = vcmp.eq.s32.totalorder %v1628, 1
        %v1630 = vsel %vm1629, %v1619, -inf
        %v1631 = vsel %vm1629, %v1620, -inf
        %v1632 = vsel %vm1629, %v1621, -inf
        %v1633 = vsel %vm1629, %v1622, -inf
        %v1634 = vsel %vm1433, %v1630, -inf
        %1635 = vmax.xlane.f32.xlu0 %v1634
        %v1636 = vpop.xlane.xlu0 %1635
        %v1637 = vsel %vm1433, %v1631, -inf
        %1638 = vmax.xlane.f32.xlu0 %v1637
        %v1639 = vpop.xlane.xlu0 %1638
        %v1640 = vsel %vm1433, %v1632, -inf
        %1641 = vmax.xlane.f32.xlu0 %v1640
        %v1642 = vpop.xlane.xlu0 %1641
        %v1643 = vsel %vm1433, %v1633, -inf
        %1644 = vmax.xlane.f32.xlu0 %v1643
        %v1645 = vpop.xlane.xlu0 %1644
        %v1646 = vsub.f32 %v1630, %v1636
        %v1647 = vsub.f32 %v1631, %v1639
        %v1648 = vsub.f32 %v1632, %v1642
        %v1649 = vsub.f32 %v1633, %v1645
        %v1650 = vmul.f32 %v1646, 1.442695
        %v1651 = vpow.pop %v1650
        %v1652 = vmul.f32 %v1647, 1.442695
        %v1653 = vpow.pop %v1652
        %v1654 = vmul.f32 %v1648, 1.442695
        %v1655 = vpow.pop %v1654
        %v1656 = vmul.f32 %v1649, 1.442695
        %v1657 = vpow.pop %v1656
        %v1658 = vsel %vm1433, %v1651, 0.0
        %1659 = vadd.xlane.f32.xlu0 %v1658
        %v1660 = vpop.xlane.xlu0 %1659
        %v1661 = vsel %vm1433, %v1653, 0.0
        %1662 = vadd.xlane.f32.xlu0 %v1661
        %v1663 = vpop.xlane.xlu0 %1662
        %v1664 = vsel %vm1433, %v1655, 0.0
        %1665 = vadd.xlane.f32.xlu0 %v1664
        %v1666 = vpop.xlane.xlu0 %1665
        %v1667 = vsel %vm1433, %v1657, 0.0
        %1668 = vadd.xlane.f32.xlu0 %v1667
        %v1669 = vpop.xlane.xlu0 %1668
        %v1670 = vrcp.pop %v1660
        %v1671 = vrcp.pop %v1663
        %v1672 = vrcp.pop %v1666
        %v1673 = vrcp.pop %v1669
        %v1674 = vmul.f32 %v1651, %v1670
        %v1675 = vmul.f32 %v1653, %v1671
        %v1676 = vmul.f32 %v1655, %v1672
        %v1677 = vmul.f32 %v1657, %v1673
        %v1678 = vpack.c.bf16 %v1674, %v1674
        %v1679 = vpack.c.bf16 %v1675, %v1675
        %v1680 = vpack.c.bf16 %v1676, %v1676
        %v1681 = vpack.c.bf16 %v1677, %v1677
        %v1682 = vpack.c.bf16 %v909, %v909
        %v1683 = vpack.c.bf16 %v933, %v933
        %v1684 = vpack.c.bf16 %v916, %v916
        %v1685 = vpack.c.bf16 %v934, %v934
        %v1686 = vpack.c.bf16 %v925, %v925
        %v1687 = vpack.c.bf16 %v935, %v935
        %v1688 = vpack.c.bf16 %v932, %v932
        %v1689 = vpack.c.bf16 %v936, %v936
        %1690 = vxpose.xlu0.c.b16.start [1/8] %v1682, 128
        %1691 = vxpose.xlu0.c.b16.cont [2/8] 0, 128
        %1692 = vxpose.xlu0.c.b16.cont [3/8] 0, 128
        %1693 = vxpose.xlu0.c.b16.cont [4/8] 0, 128
        %1694 = vxpose.xlu0.c.b16.cont [5/8] 0, 128
        %1695 = vxpose.xlu0.c.b16.cont [6/8] 0, 128
        %1696 = vxpose.xlu0.c.b16.cont [7/8] 0, 128
        %1697 = vxpose.xlu0.c.b16.end [8/8] 0, 128
        %v1698 = vpop.trf.xlu0
        %v1699 = vpop.trf.xlu0
        %v1700 = vpop.trf.xlu0
        %v1701 = vpop.trf.xlu0
        %v1702 = vpop.trf.xlu0
        %v1703 = vpop.trf.xlu0
        %v1704 = vpop.trf.xlu0
        %v1705 = vpop.trf.xlu0
        %1706 = vxpose.xlu0.c.b16.start [1/8] %v1683, 128
        %1707 = vxpose.xlu0.c.b16.cont [2/8] 0, 128
        %1708 = vxpose.xlu0.c.b16.cont [3/8] 0, 128
        %1709 = vxpose.xlu0.c.b16.cont [4/8] 0, 128
        %1710 = vxpose.xlu0.c.b16.cont [5/8] 0, 128
        %1711 = vxpose.xlu0.c.b16.cont [6/8] 0, 128
        %1712 = vxpose.xlu0.c.b16.cont [7/8] 0, 128
        %1713 = vxpose.xlu0.c.b16.end [8/8] 0, 128
        %v1714 = vpop.trf.xlu0
        %v1715 = vpop.trf.xlu0
        %v1716 = vpop.trf.xlu0
        %v1717 = vpop.trf.xlu0
        %v1718 = vpop.trf.xlu0
        %v1719 = vpop.trf.xlu0
        %v1720 = vpop.trf.xlu0
        %v1721 = vpop.trf.xlu0
        %1722 = vxpose.xlu0.c.b16.start [1/8] %v1684, 128
        %1723 = vxpose.xlu0.c.b16.cont [2/8] 0, 128
        %1724 = vxpose.xlu0.c.b16.cont [3/8] 0, 128
        %1725 = vxpose.xlu0.c.b16.cont [4/8] 0, 128
        %1726 = vxpose.xlu0.c.b16.cont [5/8] 0, 128
        %1727 = vxpose.xlu0.c.b16.cont [6/8] 0, 128
        %1728 = vxpose.xlu0.c.b16.cont [7/8] 0, 128
        %1729 = vxpose.xlu0.c.b16.end [8/8] 0, 128
        %v1730 = vpop.trf.xlu0
        %v1731 = vpop.trf.xlu0
        %v1732 = vpop.trf.xlu0
        %v1733 = vpop.trf.xlu0
        %v1734 = vpop.trf.xlu0
        %v1735 = vpop.trf.xlu0
        %v1736 = vpop.trf.xlu0
        %v1737 = vpop.trf.xlu0
        %1738 = vxpose.xlu0.c.b16.start [1/8] %v1685, 128
        %1739 = vxpose.xlu0.c.b16.cont [2/8] 0, 128
        %1740 = vxpose.xlu0.c.b16.cont [3/8] 0, 128
        %1741 = vxpose.xlu0.c.b16.cont [4/8] 0, 128
        %1742 = vxpose.xlu0.c.b16.cont [5/8] 0, 128
        %1743 = vxpose.xlu0.c.b16.cont [6/8] 0, 128
        %1744 = vxpose.xlu0.c.b16.cont [7/8] 0, 128
        %1745 = vxpose.xlu0.c.b16.end [8/8] 0, 128
        %v1746 = vpop.trf.xlu0
        %v1747 = vpop.trf.xlu0
        %v1748 = vpop.trf.xlu0
        %v1749 = vpop.trf.xlu0
        %v1750 = vpop.trf.xlu0
        %v1751 = vpop.trf.xlu0
        %v1752 = vpop.trf.xlu0
        %v1753 = vpop.trf.xlu0
        %1754 = vxpose.xlu0.c.b16.start [1/8] %v1686, 128
        %1755 = vxpose.xlu0.c.b16.cont [2/8] 0, 128
        %1756 = vxpose.xlu0.c.b16.cont [3/8] 0, 128
        %1757 = vxpose.xlu0.c.b16.cont [4/8] 0, 128
        %1758 = vxpose.xlu0.c.b16.cont [5/8] 0, 128
        %1759 = vxpose.xlu0.c.b16.cont [6/8] 0, 128
        %1760 = vxpose.xlu0.c.b16.cont [7/8] 0, 128
        %1761 = vxpose.xlu0.c.b16.end [8/8] 0, 128
        %v1762 = vpop.trf.xlu0
        %v1763 = vpop.trf.xlu0
        %v1764 = vpop.trf.xlu0
        %v1765 = vpop.trf.xlu0
        %v1766 = vpop.trf.xlu0
        %v1767 = vpop.trf.xlu0
        %v1768 = vpop.trf.xlu0
        %v1769 = vpop.trf.xlu0
        %1770 = vxpose.xlu0.c.b16.start [1/8] %v1687, 128
        %1771 = vxpose.xlu0.c.b16.cont [2/8] 0, 128
        %1772 = vxpose.xlu0.c.b16.cont [3/8] 0, 128
        %1773 = vxpose.xlu0.c.b16.cont [4/8] 0, 128
        %1774 = vxpose.xlu0.c.b16.cont [5/8] 0, 128
        %1775 = vxpose.xlu0.c.b16.cont [6/8] 0, 128
        %1776 = vxpose.xlu0.c.b16.cont [7/8] 0, 128
        %1777 = vxpose.xlu0.c.b16.end [8/8] 0, 128
        %v1778 = vpop.trf.xlu0
        %v1779 = vpop.trf.xlu0
        %v1780 = vpop.trf.xlu0
        %v1781 = vpop.trf.xlu0
        %v1782 = vpop.trf.xlu0
        %v1783 = vpop.trf.xlu0
        %v1784 = vpop.trf.xlu0
        %v1785 = vpop.trf.xlu0
        %1786 = vxpose.xlu0.c.b16.start [1/8] %v1688, 128
        %1787 = vxpose.xlu0.c.b16.cont [2/8] 0, 128
        %1788 = vxpose.xlu0.c.b16.cont [3/8] 0, 128
        %1789 = vxpose.xlu0.c.b16.cont [4/8] 0, 128
        %1790 = vxpose.xlu0.c.b16.cont [5/8] 0, 128
        %1791 = vxpose.xlu0.c.b16.cont [6/8] 0, 128
        %1792 = vxpose.xlu0.c.b16.cont [7/8] 0, 128
        %1793 = vxpose.xlu0.c.b16.end [8/8] 0, 128
        %v1794 = vpop.trf.xlu0
        %v1795 = vpop.trf.xlu0
        %v1796 = vpop.trf.xlu0
        %v1797 = vpop.trf.xlu0
        %v1798 = vpop.trf.xlu0
        %v1799 = vpop.trf.xlu0
        %v1800 = vpop.trf.xlu0
        %v1801 = vpop.trf.xlu0
        %1802 = vxpose.xlu0.c.b16.start [1/8] %v1689, 128
        %1803 = vxpose.xlu0.c.b16.cont [2/8] 0, 128
        %1804 = vxpose.xlu0.c.b16.cont [3/8] 0, 128
        %1805 = vxpose.xlu0.c.b16.cont [4/8] 0, 128
        %1806 = vxpose.xlu0.c.b16.cont [5/8] 0, 128
        %1807 = vxpose.xlu0.c.b16.cont [6/8] 0, 128
        %1808 = vxpose.xlu0.c.b16.cont [7/8] 0, 128
        %1809 = vxpose.xlu0.c.b16.end [8/8] 0, 128
        %v1810 = vpop.trf.xlu0
        %v1811 = vpop.trf.xlu0
        %v1812 = vpop.trf.xlu0
        %v1813 = vpop.trf.xlu0
        %v1814 = vpop.trf.xlu0
        %v1815 = vpop.trf.xlu0
        %v1816 = vpop.trf.xlu0
        %v1817 = vpop.trf.xlu0
        %v1818 = vcombine.low %v1698, %v1762
        %v1820 = vunpack.c.l.s4 1983009808
        %v1821 = vunpack.c.0.s8 %v1820
        %v1822 = vlaneseq
        %v1823 = vshrl.u32 %v1822, 7
        %v1824 = vsub.s32 %v1821, %v1823
        %v1825 = vrot.slane %v1818, %v1824
        %v1826 = vcombine.low %v1730, %v1794
        %v1828 = vunpack.c.l.s4 1983009808
        %v1829 = vunpack.c.0.s8 %v1828
        %v1830 = vlaneseq
        %v1831 = vshrl.u32 %v1830, 7
        %v1832 = vsub.s32 %v1829, %v1831
        %v1833 = vrot.slane %v1826, %v1832
        %v1834 = vcombine.low %v1825, %v1833
        %v1835 = vcombine.high %v1825, %v1833
        %v1837 = vunpack.c.l.s4 1934713408
        %v1838 = vunpack.c.0.s8 %v1837
        %v1839 = vlaneseq
        %v1840 = vshrl.u32 %v1839, 7
        %v1841 = vsub.s32 %v1838, %v1840
        %v1842 = vrot.slane %v1834, %v1841
        %v1844 = vunpack.c.l.s4 1934713408
        %v1845 = vunpack.c.0.s8 %v1844
        %v1846 = vlaneseq
        %v1847 = vshrl.u32 %v1846, 7
        %v1848 = vsub.s32 %v1845, %v1847
        %v1849 = vrot.slane %v1835, %v1848
        %v1850 = vcombine.high %v1842, 0
        %v1851 = vcombine.high %v1849, 0
        %v1852 = vcombine.low %v1714, %v1778
        %v1854 = vunpack.c.l.s4 1983009808
        %v1855 = vunpack.c.0.s8 %v1854
        %v1856 = vlaneseq
        %v1857 = vshrl.u32 %v1856, 7
        %v1858 = vsub.s32 %v1855, %v1857
        %v1859 = vrot.slane %v1852, %v1858
        %v1860 = vcombine.low %v1746, %v1810
        %v1862 = vunpack.c.l.s4 1983009808
        %v1863 = vunpack.c.0.s8 %v1862
        %v1864 = vlaneseq
        %v1865 = vshrl.u32 %v1864, 7
        %v1866 = vsub.s32 %v1863, %v1865
        %v1867 = vrot.slane %v1860, %v1866
        %v1868 = vcombine.low %v1859, %v1867
        %v1869 = vcombine.high %v1859, %v1867
        %v1871 = vunpack.c.l.s4 1934713408
        %v1872 = vunpack.c.0.s8 %v1871
        %v1873 = vlaneseq
        %v1874 = vshrl.u32 %v1873, 7
        %v1875 = vsub.s32 %v1872, %v1874
        %v1876 = vrot.slane %v1868, %v1875
        %v1878 = vunpack.c.l.s4 1934713408
        %v1879 = vunpack.c.0.s8 %v1878
        %v1880 = vlaneseq
        %v1881 = vshrl.u32 %v1880, 7
        %v1882 = vsub.s32 %v1879, %v1881
        %v1883 = vrot.slane %v1869, %v1882
        %v1884 = vcombine.high %v1876, 0
        %v1885 = vcombine.high %v1883, 0
        %v1888 = vpack.i.b16 %v1876, %v1842
        %v1890 = vshrl.u32 %v1842, 16
        %v1891 = vshrl.u32 %v1876, 16
        %v1892 = vpack.i.b16 %v1891, %v1890
        %v1896 = vpack.i.b16 %v1884, %v1850
        %v1898 = vshrl.u32 %v1850, 16
        %v1899 = vshrl.u32 %v1884, 16
        %v1900 = vpack.i.b16 %v1899, %v1898
        %v1904 = vpack.i.b16 %v1883, %v1849
        %v1906 = vshrl.u32 %v1849, 16
        %v1907 = vshrl.u32 %v1883, 16
        %v1908 = vpack.i.b16 %v1907, %v1906
        %v1912 = vpack.i.b16 %v1885, %v1851
        %v1914 = vshrl.u32 %v1851, 16
        %v1915 = vshrl.u32 %v1885, 16
        %v1916 = vpack.i.b16 %v1915, %v1914
        %1918 = vxpose.xlu0.c.b16.start [1/8] %v1888, 128
        %1919 = vxpose.xlu0.c.b16.cont [2/8] 0, 128
        %1920 = vxpose.xlu0.c.b16.cont [3/8] 0, 128
        %1921 = vxpose.xlu0.c.b16.cont [4/8] 0, 128
        %1922 = vxpose.xlu0.c.b16.cont [5/8] 0, 128
        %1923 = vxpose.xlu0.c.b16.cont [6/8] 0, 128
        %1924 = vxpose.xlu0.c.b16.cont [7/8] 0, 128
        %1925 = vxpose.xlu0.c.b16.end [8/8] 0, 128
        %v1926 = vpop.trf.xlu0
        %v1927 = vpop.trf.xlu0
        %v1928 = vpop.trf.xlu0
        %v1929 = vpop.trf.xlu0
        %v1930 = vpop.trf.xlu0
        %v1931 = vpop.trf.xlu0
        %v1932 = vpop.trf.xlu0
        %v1933 = vpop.trf.xlu0
        %1934 = vxpose.xlu0.c.b16.start [1/8] %v1892, 128
        %1935 = vxpose.xlu0.c.b16.cont [2/8] 0, 128
        %1936 = vxpose.xlu0.c.b16.cont [3/8] 0, 128
        %1937 = vxpose.xlu0.c.b16.cont [4/8] 0, 128
        %1938 = vxpose.xlu0.c.b16.cont [5/8] 0, 128
        %1939 = vxpose.xlu0.c.b16.cont [6/8] 0, 128
        %1940 = vxpose.xlu0.c.b16.cont [7/8] 0, 128
        %1941 = vxpose.xlu0.c.b16.end [8/8] 0, 128
        %v1942 = vpop.trf.xlu0
        %v1943 = vpop.trf.xlu0
        %v1944 = vpop.trf.xlu0
        %v1945 = vpop.trf.xlu0
        %v1946 = vpop.trf.xlu0
        %v1947 = vpop.trf.xlu0
        %v1948 = vpop.trf.xlu0
        %v1949 = vpop.trf.xlu0
        %1950 = vxpose.xlu0.c.b16.start [1/8] %v1896, 128
        %1951 = vxpose.xlu0.c.b16.cont [2/8] 0, 128
        %1952 = vxpose.xlu0.c.b16.cont [3/8] 0, 128
        %1953 = vxpose.xlu0.c.b16.cont [4/8] 0, 128
        %1954 = vxpose.xlu0.c.b16.cont [5/8] 0, 128
        %1955 = vxpose.xlu0.c.b16.cont [6/8] 0, 128
        %1956 = vxpose.xlu0.c.b16.cont [7/8] 0, 128
        %1957 = vxpose.xlu0.c.b16.end [8/8] 0, 128
        %v1958 = vpop.trf.xlu0
        %v1959 = vpop.trf.xlu0
        %v1960 = vpop.trf.xlu0
        %v1961 = vpop.trf.xlu0
        %v1962 = vpop.trf.xlu0
        %v1963 = vpop.trf.xlu0
        %v1964 = vpop.trf.xlu0
        %v1965 = vpop.trf.xlu0
        %1966 = vxpose.xlu0.c.b16.start [1/8] %v1900, 128
        %1967 = vxpose.xlu0.c.b16.cont [2/8] 0, 128
        %1968 = vxpose.xlu0.c.b16.cont [3/8] 0, 128
        %1969 = vxpose.xlu0.c.b16.cont [4/8] 0, 128
        %1970 = vxpose.xlu0.c.b16.cont [5/8] 0, 128
        %1971 = vxpose.xlu0.c.b16.cont [6/8] 0, 128
        %1972 = vxpose.xlu0.c.b16.cont [7/8] 0, 128
        %1973 = vxpose.xlu0.c.b16.end [8/8] 0, 128
        %v1974 = vpop.trf.xlu0
        %v1975 = vpop.trf.xlu0
        %v1976 = vpop.trf.xlu0
        %v1977 = vpop.trf.xlu0
        %v1978 = vpop.trf.xlu0
        %v1979 = vpop.trf.xlu0
        %v1980 = vpop.trf.xlu0
        %v1981 = vpop.trf.xlu0
        %1982 = vxpose.xlu0.c.b16.start [1/8] %v1904, 128
        %1983 = vxpose.xlu0.c.b16.cont [2/8] 0, 128
        %1984 = vxpose.xlu0.c.b16.cont [3/8] 0, 128
        %1985 = vxpose.xlu0.c.b16.cont [4/8] 0, 128
        %1986 = vxpose.xlu0.c.b16.cont [5/8] 0, 128
        %1987 = vxpose.xlu0.c.b16.cont [6/8] 0, 128
        %1988 = vxpose.xlu0.c.b16.cont [7/8] 0, 128
        %1989 = vxpose.xlu0.c.b16.end [8/8] 0, 128
        %v1990 = vpop.trf.xlu0
        %v1991 = vpop.trf.xlu0
        %v1992 = vpop.trf.xlu0
        %v1993 = vpop.trf.xlu0
        %v1994 = vpop.trf.xlu0
        %v1995 = vpop.trf.xlu0
        %v1996 = vpop.trf.xlu0
        %v1997 = vpop.trf.xlu0
        %1998 = vxpose.xlu0.c.b16.start [1/8] %v1908, 128
        %1999 = vxpose.xlu0.c.b16.cont [2/8] 0, 128
        %2000 = vxpose.xlu0.c.b16.cont [3/8] 0, 128
        %2001 = vxpose.xlu0.c.b16.cont [4/8] 0, 128
        %2002 = vxpose.xlu0.c.b16.cont [5/8] 0, 128
        %2003 = vxpose.xlu0.c.b16.cont [6/8] 0, 128
        %2004 = vxpose.xlu0.c.b16.cont [7/8] 0, 128
        %2005 = vxpose.xlu0.c.b16.end [8/8] 0, 128
        %v2006 = vpop.trf.xlu0
        %v2007 = vpop.trf.xlu0
        %v2008 = vpop.trf.xlu0
        %v2009 = vpop.trf.xlu0
        %v2010 = vpop.trf.xlu0
        %v2011 = vpop.trf.xlu0
        %v2012 = vpop.trf.xlu0
        %v2013 = vpop.trf.xlu0
        %2014 = vxpose.xlu0.c.b16.start [1/8] %v1912, 128
        %2015 = vxpose.xlu0.c.b16.cont [2/8] 0, 128
        %2016 = vxpose.xlu0.c.b16.cont [3/8] 0, 128
        %2017 = vxpose.xlu0.c.b16.cont [4/8] 0, 128
        %2018 = vxpose.xlu0.c.b16.cont [5/8] 0, 128
        %2019 = vxpose.xlu0.c.b16.cont [6/8] 0, 128
        %2020 = vxpose.xlu0.c.b16.cont [7/8] 0, 128
        %2021 = vxpose.xlu0.c.b16.end [8/8] 0, 128
        %v2022 = vpop.trf.xlu0
        %v2023 = vpop.trf.xlu0
        %v2024 = vpop.trf.xlu0
        %v2025 = vpop.trf.xlu0
        %v2026 = vpop.trf.xlu0
        %v2027 = vpop.trf.xlu0
        %v2028 = vpop.trf.xlu0
        %v2029 = vpop.trf.xlu0
        %2030 = vxpose.xlu0.c.b16.start [1/8] %v1916, 128
        %2031 = vxpose.xlu0.c.b16.cont [2/8] 0, 128
        %2032 = vxpose.xlu0.c.b16.cont [3/8] 0, 128
        %2033 = vxpose.xlu0.c.b16.cont [4/8] 0, 128
        %2034 = vxpose.xlu0.c.b16.cont [5/8] 0, 128
        %2035 = vxpose.xlu0.c.b16.cont [6/8] 0, 128
        %2036 = vxpose.xlu0.c.b16.cont [7/8] 0, 128
        %2037 = vxpose.xlu0.c.b16.end [8/8] 0, 128
        %v2038 = vpop.trf.xlu0
        %v2039 = vpop.trf.xlu0
        %v2040 = vpop.trf.xlu0
        %v2041 = vpop.trf.xlu0
        %v2042 = vpop.trf.xlu0
        %v2043 = vpop.trf.xlu0
        %v2044 = vpop.trf.xlu0
        %v2045 = vpop.trf.xlu0
        %v2046 = vcombine.low %v1926, %v1990
        %v2048 = vunpack.c.l.s4 1983009808
        %v2049 = vunpack.c.0.s8 %v2048
        %v2050 = vlaneseq
        %v2051 = vshrl.u32 %v2050, 7
        %v2052 = vsub.s32 %v2049, %v2051
        %v2053 = vrot.slane %v2046, %v2052
        %v2054 = vcombine.low %v1958, %v2022
        %v2056 = vunpack.c.l.s4 1983009808
        %v2057 = vunpack.c.0.s8 %v2056
        %v2058 = vlaneseq
        %v2059 = vshrl.u32 %v2058, 7
        %v2060 = vsub.s32 %v2057, %v2059
        %v2061 = vrot.slane %v2054, %v2060
        %v2062 = vcombine.low %v2053, %v2061
        %v2064 = vunpack.c.l.s4 1934713408
        %v2065 = vunpack.c.0.s8 %v2064
        %v2066 = vlaneseq
        %v2067 = vshrl.u32 %v2066, 7
        %v2068 = vsub.s32 %v2065, %v2067
        %v2069 = vrot.slane %v2062, %v2068
        %v2070 = vcombine.high %v2069, 0
        %v2071 = vcombine.low %v1942, %v2006
        %v2073 = vunpack.c.l.s4 1983009808
        %v2074 = vunpack.c.0.s8 %v2073
        %v2075 = vlaneseq
        %v2076 = vshrl.u32 %v2075, 7
        %v2077 = vsub.s32 %v2074, %v2076
        %v2078 = vrot.slane %v2071, %v2077
        %v2079 = vcombine.low %v1974, %v2038
        %v2081 = vunpack.c.l.s4 1983009808
        %v2082 = vunpack.c.0.s8 %v2081
        %v2083 = vlaneseq
        %v2084 = vshrl.u32 %v2083, 7
        %v2085 = vsub.s32 %v2082, %v2084
        %v2086 = vrot.slane %v2079, %v2085
        %v2087 = vcombine.low %v2078, %v2086
        %v2089 = vunpack.c.l.s4 1934713408
        %v2090 = vunpack.c.0.s8 %v2089
        %v2091 = vlaneseq
        %v2092 = vshrl.u32 %v2091, 7
        %v2093 = vsub.s32 %v2090, %v2092
        %v2094 = vrot.slane %v2087, %v2093
        %v2095 = vcombine.high %v2094, 0
        %v2098 = vpack.i.b16 %v2094, %v2069
        %v2099 = vshrl.u32 %v2069, 16
        %v2100 = vshrl.u32 %v2094, 16
        %v2101 = vpack.i.b16 %v2100, %v2099
        %v2104 = vpack.i.b16 %v2095, %v2070
        %v2105 = vshrl.u32 %v2070, 16
        %v2106 = vshrl.u32 %v2095, 16
        %v2107 = vpack.i.b16 %v2106, %v2105
        %v2109 = vsel %vm1433, %v2098, 0
        %v2112 = vsel %vm1433, %v1678, 0
        %2114 = vmatprep.subr.bf16.mxu0 0
        %2115 = vmatpush1.bf16.xpose.msra.mxu0 %v2112
        %2116 = vmatprep.subr.bf16.mxu0 0
        %2117 = vmatpush1.bf16.xpose.msra.mxu0 0
        %2118 = vmatprep.subr.bf16.mxu0 0
        %2119 = vmatpush1.bf16.xpose.msra.mxu0 0
        %2120 = vmatprep.subr.bf16.mxu0 0
        %2121 = vmatpush1.bf16.xpose.msra.mxu0 0
        %2122 = vmatprep.subr.bf16.mxu0 0
        %2123 = vmatpush1.bf16.xpose.msra.mxu0 0
        %2124 = vmatprep.subr.bf16.mxu0 0
        %2125 = vmatpush1.bf16.xpose.msra.mxu0 0
        %2126 = vmatprep.subr.bf16.mxu0 0
        %2127 = vmatpush1.bf16.xpose.msra.mxu0 0
        %2128 = vmatprep.subr.bf16.mxu0 0
        %2129 = vmatpush1.bf16.xpose.msra.mxu0 0
        %2130 = vmatprep.subr.bf16.mxu0 0
        %2131 = vmatpush1.bf16.xpose.msra.mxu0 0
        %2132 = vmatprep.subr.bf16.mxu0 0
        %2133 = vmatpush1.bf16.xpose.msra.mxu0 0
        %2134 = vmatprep.subr.bf16.mxu0 0
        %2135 = vmatpush1.bf16.xpose.msra.mxu0 0
        %2136 = vmatprep.subr.bf16.mxu0 0
        %2137 = vmatpush1.bf16.xpose.msra.mxu0 0
        %2138 = vmatprep.subr.bf16.mxu0 0
        %2139 = vmatpush1.bf16.xpose.msra.mxu0 0
        %2140 = vmatprep.subr.bf16.mxu0 0
        %2141 = vmatpush1.bf16.xpose.msra.mxu0 0
        %2142 = vmatprep.subr.bf16.mxu0 0
        %2143 = vmatpush1.bf16.xpose.msra.mxu0 0
        %2144 = vmatprep.subr.bf16.mxu0 0
        %2145 = vmatpush1.bf16.xpose.msra.mxu0 0
        %2146 = vmatprep.mubr.bf16.mxu0 0
        %2147 = vmatmul.mubr.bf16.gmra.mrb[0].mxu0 %v2109
        %v2148 = vpop.f32.mrb[0].mxu0
        %v2149 = vadd.f32 0.0, %v2148
        %v2150 = vpop.f32.mrb[0].mxu0
        %v2151 = vpop.f32.mrb[0].mxu0
        %v2152 = vpop.f32.mrb[0].mxu0
        %2153 = vdwg.mxu0
        %v2155 = vsel %vm1433, %v2101, 0
        %v2158 = vsel %vm1433, %v1679, 0
        %2160 = vmatprep.subr.bf16.mxu0 0
        %2161 = vmatpush1.bf16.xpose.msra.mxu0 %v2158
        %2162 = vmatprep.subr.bf16.mxu0 0
        %2163 = vmatpush1.bf16.xpose.msra.mxu0 0
        %2164 = vmatprep.subr.bf16.mxu0 0
        %2165 = vmatpush1.bf16.xpose.msra.mxu0 0
        %2166 = vmatprep.subr.bf16.mxu0 0
        %2167 = vmatpush1.bf16.xpose.msra.mxu0 0
        %2168 = vmatprep.subr.bf16.mxu0 0
        %2169 = vmatpush1.bf16.xpose.msra.mxu0 0
        %2170 = vmatprep.subr.bf16.mxu0 0
        %2171 = vmatpush1.bf16.xpose.msra.mxu0 0
        %2172 = vmatprep.subr.bf16.mxu0 0
        %2173 = vmatpush1.bf16.xpose.msra.mxu0 0
        %2174 = vmatprep.subr.bf16.mxu0 0
        %2175 = vmatpush1.bf16.xpose.msra.mxu0 0
        %2176 = vmatprep.subr.bf16.mxu0 0
        %2177 = vmatpush1.bf16.xpose.msra.mxu0 0
        %2178 = vmatprep.subr.bf16.mxu0 0
        %2179 = vmatpush1.bf16.xpose.msra.mxu0 0
        %2180 = vmatprep.subr.bf16.mxu0 0
        %2181 = vmatpush1.bf16.xpose.msra.mxu0 0
        %2182 = vmatprep.subr.bf16.mxu0 0
        %2183 = vmatpush1.bf16.xpose.msra.mxu0 0
        %2184 = vmatprep.subr.bf16.mxu0 0
        %2185 = vmatpush1.bf16.xpose.msra.mxu0 0
        %2186 = vmatprep.subr.bf16.mxu0 0
        %2187 = vmatpush1.bf16.xpose.msra.mxu0 0
        %2188 = vmatprep.subr.bf16.mxu0 0
        %2189 = vmatpush1.bf16.xpose.msra.mxu0 0
        %2190 = vmatprep.subr.bf16.mxu0 0
        %2191 = vmatpush1.bf16.xpose.msra.mxu0 0
        %2192 = vmatprep.mubr.bf16.mxu0 0
        %2193 = vmatmul.mubr.bf16.gmra.mrb[0].mxu0 %v2155
        %v2194 = vpop.f32.mrb[0].mxu0
        %v2195 = vadd.f32 0.0, %v2194
        %v2196 = vpop.f32.mrb[0].mxu0
        %v2197 = vpop.f32.mrb[0].mxu0
        %v2198 = vpop.f32.mrb[0].mxu0
        %2199 = vdwg.mxu0
        %v2201 = vsel %vm1433, %v2104, 0
        %v2204 = vsel %vm1433, %v1680, 0
        %2206 = vmatprep.subr.bf16.mxu0 0
        %2207 = vmatpush1.bf16.xpose.msra.mxu0 %v2204
        %2208 = vmatprep.subr.bf16.mxu0 0
        %2209 = vmatpush1.bf16.xpose.msra.mxu0 0
        %2210 = vmatprep.subr.bf16.mxu0 0
        %2211 = vmatpush1.bf16.xpose.msra.mxu0 0
        %2212 = vmatprep.subr.bf16.mxu0 0
        %2213 = vmatpush1.bf16.xpose.msra.mxu0 0
        %2214 = vmatprep.subr.bf16.mxu0 0
        %2215 = vmatpush1.bf16.xpose.msra.mxu0 0
        %2216 = vmatprep.subr.bf16.mxu0 0
        %2217 = vmatpush1.bf16.xpose.msra.mxu0 0
        %2218 = vmatprep.subr.bf16.mxu0 0
        %2219 = vmatpush1.bf16.xpose.msra.mxu0 0
        %2220 = vmatprep.subr.bf16.mxu0 0
        %2221 = vmatpush1.bf16.xpose.msra.mxu0 0
        %2222 = vmatprep.subr.bf16.mxu0 0
        %2223 = vmatpush1.bf16.xpose.msra.mxu0 0
        %2224 = vmatprep.subr.bf16.mxu0 0
        %2225 = vmatpush1.bf16.xpose.msra.mxu0 0
        %2226 = vmatprep.subr.bf16.mxu0 0
        %2227 = vmatpush1.bf16.xpose.msra.mxu0 0
        %2228 = vmatprep.subr.bf16.mxu0 0
        %2229 = vmatpush1.bf16.xpose.msra.mxu0 0
        %2230 = vmatprep.subr.bf16.mxu0 0
        %2231 = vmatpush1.bf16.xpose.msra.mxu0 0
        %2232 = vmatprep.subr.bf16.mxu0 0
        %2233 = vmatpush1.bf16.xpose.msra.mxu0 0
        %2234 = vmatprep.subr.bf16.mxu0 0
        %2235 = vmatpush1.bf16.xpose.msra.mxu0 0
        %2236 = vmatprep.subr.bf16.mxu0 0
        %2237 = vmatpush1.bf16.xpose.msra.mxu0 0
        %2238 = vmatprep.mubr.bf16.mxu0 0
        %2239 = vmatmul.mubr.bf16.gmra.mrb[0].mxu0 %v2201
        %v2240 = vpop.f32.mrb[0].mxu0
        %v2241 = vadd.f32 0.0, %v2240
        %v2242 = vpop.f32.mrb[0].mxu0
        %v2243 = vpop.f32.mrb[0].mxu0
        %v2244 = vpop.f32.mrb[0].mxu0
        %2245 = vdwg.mxu0
        %v2247 = vsel %vm1433, %v2107, 0
        %v2250 = vsel %vm1433, %v1681, 0
        %2252 = vmatprep.subr.bf16.mxu0 0
        %2253 = vmatpush1.bf16.xpose.msra.mxu0 %v2250
        %2254 = vmatprep.subr.bf16.mxu0 0
        %2255 = vmatpush1.bf16.xpose.msra.mxu0 0
        %2256 = vmatprep.subr.bf16.mxu0 0
        %2257 = vmatpush1.bf16.xpose.msra.mxu0 0
        %2258 = vmatprep.subr.bf16.mxu0 0
        %2259 = vmatpush1.bf16.xpose.msra.mxu0 0
        %2260 = vmatprep.subr.bf16.mxu0 0
        %2261 = vmatpush1.bf16.xpose.msra.mxu0 0
        %2262 = vmatprep.subr.bf16.mxu0 0
        %2263 = vmatpush1.bf16.xpose.msra.mxu0 0
        %2264 = vmatprep.subr.bf16.mxu0 0
        %2265 = vmatpush1.bf16.xpose.msra.mxu0 0
        %2266 = vmatprep.subr.bf16.mxu0 0
        %2267 = vmatpush1.bf16.xpose.msra.mxu0 0
        %2268 = vmatprep.subr.bf16.mxu0 0
        %2269 = vmatpush1.bf16.xpose.msra.mxu0 0
        %2270 = vmatprep.subr.bf16.mxu0 0
        %2271 = vmatpush1.bf16.xpose.msra.mxu0 0
        %2272 = vmatprep.subr.bf16.mxu0 0
        %2273 = vmatpush1.bf16.xpose.msra.mxu0 0
        %2274 = vmatprep.subr.bf16.mxu0 0
        %2275 = vmatpush1.bf16.xpose.msra.mxu0 0
        %2276 = vmatprep.subr.bf16.mxu0 0
        %2277 = vmatpush1.bf16.xpose.msra.mxu0 0
        %2278 = vmatprep.subr.bf16.mxu0 0
        %2279 = vmatpush1.bf16.xpose.msra.mxu0 0
        %2280 = vmatprep.subr.bf16.mxu0 0
        %2281 = vmatpush1.bf16.xpose.msra.mxu0 0
        %2282 = vmatprep.subr.bf16.mxu0 0
        %2283 = vmatpush1.bf16.xpose.msra.mxu0 0
        %2284 = vmatprep.mubr.bf16.mxu0 0
        %2285 = vmatmul.mubr.bf16.gmra.mrb[0].mxu0 %v2247
        %v2286 = vpop.f32.mrb[0].mxu0
        %v2287 = vadd.f32 0.0, %v2286
        %v2288 = vpop.f32.mrb[0].mxu0
        %v2289 = vpop.f32.mrb[0].mxu0
        %v2290 = vpop.f32.mrb[0].mxu0
        %2291 = vdwg.mxu0
        %2292 = vxpose.xlu0.b32.start [1/16] %v2149, 128
        %2293 = vxpose.xlu0.b32.cont [2/16] 0.0, 128
        %2294 = vxpose.xlu0.b32.cont [3/16] 0.0, 128
        %2295 = vxpose.xlu0.b32.cont [4/16] 0.0, 128
        %2296 = vxpose.xlu0.b32.cont [5/16] 0.0, 128
        %2297 = vxpose.xlu0.b32.cont [6/16] 0.0, 128
        %2298 = vxpose.xlu0.b32.cont [7/16] 0.0, 128
        %2299 = vxpose.xlu0.b32.cont [8/16] 0.0, 128
        %2300 = vxpose.xlu0.b32.cont [9/16] 0.0, 128
        %2301 = vxpose.xlu0.b32.cont [10/16] 0.0, 128
        %2302 = vxpose.xlu0.b32.cont [11/16] 0.0, 128
        %2303 = vxpose.xlu0.b32.cont [12/16] 0.0, 128
        %2304 = vxpose.xlu0.b32.cont [13/16] 0.0, 128
        %2305 = vxpose.xlu0.b32.cont [14/16] 0.0, 128
        %2306 = vxpose.xlu0.b32.cont [15/16] 0.0, 128
        %2307 = vxpose.xlu0.b32.end [16/16] 0.0, 128
        %v2308 = vpop.trf.xlu0
        %v2309 = vpop.trf.xlu0
        %v2310 = vpop.trf.xlu0
        %v2311 = vpop.trf.xlu0
        %v2312 = vpop.trf.xlu0
        %v2313 = vpop.trf.xlu0
        %v2314 = vpop.trf.xlu0
        %v2315 = vpop.trf.xlu0
        %v2316 = vpop.trf.xlu0
        %v2317 = vpop.trf.xlu0
        %v2318 = vpop.trf.xlu0
        %v2319 = vpop.trf.xlu0
        %v2320 = vpop.trf.xlu0
        %v2321 = vpop.trf.xlu0
        %v2322 = vpop.trf.xlu0
        %v2323 = vpop.trf.xlu0
        %2324 = vxpose.xlu0.b32.start [1/16] %v2195, 128
        %2325 = vxpose.xlu0.b32.cont [2/16] 0.0, 128
        %2326 = vxpose.xlu0.b32.cont [3/16] 0.0, 128
        %2327 = vxpose.xlu0.b32.cont [4/16] 0.0, 128
        %2328 = vxpose.xlu0.b32.cont [5/16] 0.0, 128
        %2329 = vxpose.xlu0.b32.cont [6/16] 0.0, 128
        %2330 = vxpose.xlu0.b32.cont [7/16] 0.0, 128
        %2331 = vxpose.xlu0.b32.cont [8/16] 0.0, 128
        %2332 = vxpose.xlu0.b32.cont [9/16] 0.0, 128
        %2333 = vxpose.xlu0.b32.cont [10/16] 0.0, 128
        %2334 = vxpose.xlu0.b32.cont [11/16] 0.0, 128
        %2335 = vxpose.xlu0.b32.cont [12/16] 0.0, 128
        %2336 = vxpose.xlu0.b32.cont [13/16] 0.0, 128
        %2337 = vxpose.xlu0.b32.cont [14/16] 0.0, 128
        %2338 = vxpose.xlu0.b32.cont [15/16] 0.0, 128
        %2339 = vxpose.xlu0.b32.end [16/16] 0.0, 128
        %v2340 = vpop.trf.xlu0
        %v2341 = vpop.trf.xlu0
        %v2342 = vpop.trf.xlu0
        %v2343 = vpop.trf.xlu0
        %v2344 = vpop.trf.xlu0
        %v2345 = vpop.trf.xlu0
        %v2346 = vpop.trf.xlu0
        %v2347 = vpop.trf.xlu0
        %v2348 = vpop.trf.xlu0
        %v2349 = vpop.trf.xlu0
        %v2350 = vpop.trf.xlu0
        %v2351 = vpop.trf.xlu0
        %v2352 = vpop.trf.xlu0
        %v2353 = vpop.trf.xlu0
        %v2354 = vpop.trf.xlu0
        %v2355 = vpop.trf.xlu0
        %2356 = vxpose.xlu0.b32.start [1/16] %v2241, 128
        %2357 = vxpose.xlu0.b32.cont [2/16] 0.0, 128
        %2358 = vxpose.xlu0.b32.cont [3/16] 0.0, 128
        %2359 = vxpose.xlu0.b32.cont [4/16] 0.0, 128
        %2360 = vxpose.xlu0.b32.cont [5/16] 0.0, 128
        %2361 = vxpose.xlu0.b32.cont [6/16] 0.0, 128
        %2362 = vxpose.xlu0.b32.cont [7/16] 0.0, 128
        %2363 = vxpose.xlu0.b32.cont [8/16] 0.0, 128
        %2364 = vxpose.xlu0.b32.cont [9/16] 0.0, 128
        %2365 = vxpose.xlu0.b32.cont [10/16] 0.0, 128
        %2366 = vxpose.xlu0.b32.cont [11/16] 0.0, 128
        %2367 = vxpose.xlu0.b32.cont [12/16] 0.0, 128
        %2368 = vxpose.xlu0.b32.cont [13/16] 0.0, 128
        %2369 = vxpose.xlu0.b32.cont [14/16] 0.0, 128
        %2370 = vxpose.xlu0.b32.cont [15/16] 0.0, 128
        %2371 = vxpose.xlu0.b32.end [16/16] 0.0, 128
        %v2372 = vpop.trf.xlu0
        %v2373 = vpop.trf.xlu0
        %v2374 = vpop.trf.xlu0
        %v2375 = vpop.trf.xlu0
        %v2376 = vpop.trf.xlu0
        %v2377 = vpop.trf.xlu0
        %v2378 = vpop.trf.xlu0
        %v2379 = vpop.trf.xlu0
        %v2380 = vpop.trf.xlu0
        %v2381 = vpop.trf.xlu0
        %v2382 = vpop.trf.xlu0
        %v2383 = vpop.trf.xlu0
        %v2384 = vpop.trf.xlu0
        %v2385 = vpop.trf.xlu0
        %v2386 = vpop.trf.xlu0
        %v2387 = vpop.trf.xlu0
        %2388 = vxpose.xlu0.b32.start [1/16] %v2287, 128
        %2389 = vxpose.xlu0.b32.cont [2/16] 0.0, 128
        %2390 = vxpose.xlu0.b32.cont [3/16] 0.0, 128
        %2391 = vxpose.xlu0.b32.cont [4/16] 0.0, 128
        %2392 = vxpose.xlu0.b32.cont [5/16] 0.0, 128
        %2393 = vxpose.xlu0.b32.cont [6/16] 0.0, 128
        %2394 = vxpose.xlu0.b32.cont [7/16] 0.0, 128
        %2395 = vxpose.xlu0.b32.cont [8/16] 0.0, 128
        %2396 = vxpose.xlu0.b32.cont [9/16] 0.0, 128
        %2397 = vxpose.xlu0.b32.cont [10/16] 0.0, 128
        %2398 = vxpose.xlu0.b32.cont [11/16] 0.0, 128
        %2399 = vxpose.xlu0.b32.cont [12/16] 0.0, 128
        %2400 = vxpose.xlu0.b32.cont [13/16] 0.0, 128
        %2401 = vxpose.xlu0.b32.cont [14/16] 0.0, 128
        %2402 = vxpose.xlu0.b32.cont [15/16] 0.0, 128
        %2403 = vxpose.xlu0.b32.end [16/16] 0.0, 128
        %v2404 = vpop.trf.xlu0
        %v2405 = vpop.trf.xlu0
        %v2406 = vpop.trf.xlu0
        %v2407 = vpop.trf.xlu0
        %v2408 = vpop.trf.xlu0
        %v2409 = vpop.trf.xlu0
        %v2410 = vpop.trf.xlu0
        %v2411 = vpop.trf.xlu0
        %v2412 = vpop.trf.xlu0
        %v2413 = vpop.trf.xlu0
        %v2414 = vpop.trf.xlu0
        %v2415 = vpop.trf.xlu0
        %v2416 = vpop.trf.xlu0
        %v2417 = vpop.trf.xlu0
        %v2418 = vpop.trf.xlu0
        %v2419 = vpop.trf.xlu0
        %v2420 = vcombine.low %v2308, %v2372
        %v2421 = vcombine.high %v2308, %v2372
        %v2423 = vunpack.c.l.s4 1983009808
        %v2424 = vunpack.c.0.s8 %v2423
        %v2425 = vlaneseq
        %v2426 = vshrl.u32 %v2425, 7
        %v2427 = vsub.s32 %v2424, %v2426
        %v2428 = vrot.slane %v2420, %v2427
        %v2430 = vunpack.c.l.s4 1983009808
        %v2431 = vunpack.c.0.s8 %v2430
        %v2432 = vlaneseq
        %v2433 = vshrl.u32 %v2432, 7
        %v2434 = vsub.s32 %v2431, %v2433
        %v2435 = vrot.slane %v2421, %v2434
        %v2436 = vcombine.low %v2340, %v2404
        %v2437 = vcombine.high %v2340, %v2404
        %v2439 = vunpack.c.l.s4 1983009808
        %v2440 = vunpack.c.0.s8 %v2439
        %v2441 = vlaneseq
        %v2442 = vshrl.u32 %v2441, 7
        %v2443 = vsub.s32 %v2440, %v2442
        %v2444 = vrot.slane %v2436, %v2443
        %v2446 = vunpack.c.l.s4 1983009808
        %v2447 = vunpack.c.0.s8 %v2446
        %v2448 = vlaneseq
        %v2449 = vshrl.u32 %v2448, 7
        %v2450 = vsub.s32 %v2447, %v2449
        %v2451 = vrot.slane %v2437, %v2450
        %v2452 = vcombine.low %v2428, %v2444
        %v2453 = vcombine.high %v2428, %v2444
        %v2455 = vunpack.c.l.s4 1934713408
        %v2456 = vunpack.c.0.s8 %v2455
        %v2457 = vlaneseq
        %v2458 = vshrl.u32 %v2457, 7
        %v2459 = vsub.s32 %v2456, %v2458
        %v2460 = vrot.slane %v2452, %v2459
        %v2462 = vunpack.c.l.s4 1934713408
        %v2463 = vunpack.c.0.s8 %v2462
        %v2464 = vlaneseq
        %v2465 = vshrl.u32 %v2464, 7
        %v2466 = vsub.s32 %v2463, %v2465
        %v2467 = vrot.slane %v2453, %v2466
        %v2468 = vcombine.low %v2435, %v2451
        %v2469 = vcombine.high %v2435, %v2451
        %v2471 = vunpack.c.l.s4 1934713408
        %v2472 = vunpack.c.0.s8 %v2471
        %v2473 = vlaneseq
        %v2474 = vshrl.u32 %v2473, 7
        %v2475 = vsub.s32 %v2472, %v2474
        %v2476 = vrot.slane %v2468, %v2475
        %v2478 = vunpack.c.l.s4 1934713408
        %v2479 = vunpack.c.0.s8 %v2478
        %v2480 = vlaneseq
        %v2481 = vshrl.u32 %v2480, 7
        %v2482 = vsub.s32 %v2479, %v2481
        %v2483 = vrot.slane %v2469, %v2482
        %v2484 = vcombine.high %v2460, 0.0
        %v2485 = vcombine.high %v2467, 0.0
        %v2486 = vcombine.high %v2476, 0.0
        %v2487 = vcombine.high %v2483, 0.0
        %v2488 = vcombine.low %v2460, %v2467
        %v2490 = vunpack.c.l.s4 1983009808
        %v2491 = vunpack.c.0.s8 %v2490
        %v2492 = vlaneseq
        %v2493 = vshrl.u32 %v2492, 7
        %v2494 = vsub.s32 %v2491, %v2493
        %v2495 = vrot.slane %v2488, %v2494
        %v2496 = vcombine.low %v2484, %v2485
        %v2498 = vunpack.c.l.s4 1983009808
        %v2499 = vunpack.c.0.s8 %v2498
        %v2500 = vlaneseq
        %v2501 = vshrl.u32 %v2500, 7
        %v2502 = vsub.s32 %v2499, %v2501
        %v2503 = vrot.slane %v2496, %v2502
        %v2504 = vcombine.low %v2476, %v2483
        %v2506 = vunpack.c.l.s4 1983009808
        %v2507 = vunpack.c.0.s8 %v2506
        %v2508 = vlaneseq
        %v2509 = vshrl.u32 %v2508, 7
        %v2510 = vsub.s32 %v2507, %v2509
        %v2511 = vrot.slane %v2504, %v2510
        %v2512 = vcombine.low %v2486, %v2487
        %v2514 = vunpack.c.l.s4 1983009808
        %v2515 = vunpack.c.0.s8 %v2514
        %v2516 = vlaneseq
        %v2517 = vshrl.u32 %v2516, 7
        %v2518 = vsub.s32 %v2515, %v2517
        %v2519 = vrot.slane %v2512, %v2518
        %v2520 = vcombine.low %v2495, %v2503
        %v2521 = vcombine.high %v2495, %v2503
        %v2523 = vunpack.c.l.s4 1934713408
        %v2524 = vunpack.c.0.s8 %v2523
        %v2525 = vlaneseq
        %v2526 = vshrl.u32 %v2525, 7
        %v2527 = vsub.s32 %v2524, %v2526
        %v2528 = vrot.slane %v2520, %v2527
        %v2530 = vunpack.c.l.s4 1934713408
        %v2531 = vunpack.c.0.s8 %v2530
        %v2532 = vlaneseq
        %v2533 = vshrl.u32 %v2532, 7
        %v2534 = vsub.s32 %v2531, %v2533
        %v2535 = vrot.slane %v2521, %v2534
        %v2536 = vcombine.low %v2511, %v2519
        %v2537 = vcombine.high %v2511, %v2519
        %v2539 = vunpack.c.l.s4 1934713408
        %v2540 = vunpack.c.0.s8 %v2539
        %v2541 = vlaneseq
        %v2542 = vshrl.u32 %v2541, 7
        %v2543 = vsub.s32 %v2540, %v2542
        %v2544 = vrot.slane %v2536, %v2543
        %v2546 = vunpack.c.l.s4 1934713408
        %v2547 = vunpack.c.0.s8 %v2546
        %v2548 = vlaneseq
        %v2549 = vshrl.u32 %v2548, 7
        %v2550 = vsub.s32 %v2547, %v2549
        %v2551 = vrot.slane %v2537, %v2550
        %v2552 = vcombine.low %v2528, %v2544
        %v2553 = vcombine.high %v2528, %v2544
        %v2554 = vcombine.low %v2535, %v2551
        %v2555 = vcombine.high %v2535, %v2551
        %2557 = vrot.lane.b32.xlu0 %v2553, 8
        %v2558 = vpop.permute.xlu0 %2557
        %2561 = vrot.lane.b32.xlu0 %v2554, 16
        %v2562 = vpop.permute.xlu0 %2561
        %2565 = vrot.lane.b32.xlu0 %v2555, 24
        %v2566 = vpop.permute.xlu0 %2565
        %v2568 = vsel %vm1433, %v2552, %v2558
        %vm2569 = vcmask 130048
        %v2570 = vsel %vm2569, %v2568, %v2562
        %vm2571 = vcmask 195584
        %v2572 = vsel %vm2571, %v2570, %v2566
        %v2573 = vpack.c.bf16 %v2572, %v2572
        %v2574 = vld [vmem:[%s573] sm:$0xf]
        %v2575 = vld [vmem:[%s573 + $0x4] sm:$0xf]
        %v2576 = vld [vmem:[%s573 + $0x8] sm:$0xf]
        %v2577 = vld [vmem:[%s573 + $0xc] sm:$0xf]
        %v2578 = vld [vmem:[%s576] sm:$0x1]
        %v2580 = vlaneseq
        %v2581 = vshrl.u32 %v2580, 7
        %v2582 = vsub.s32 0, %v2581
        %v2583 = vrot.slane %v2578, %v2582
        %v2589 = vunpack.c.l.b16 %v2574
        %v2590 = vunpack.c.l.b16 %v2575
        %v2591 = vunpack.c.l.b16 %v2576
        %v2592 = vunpack.c.l.b16 %v2577
        %v2593 = vpack.c.b16 %v2590, %v2589
        %v2594 = vpack.c.b16 %v2592, %v2591
        %v2598 = vsel %vm610, %v2573, 0
        %2600 = vmatprep.subr.bf16.mxu0 0
        %2601 = vmatpush1.bf16.msra.mxu0 %v2593
        %2602 = vmatprep.subr.bf16.mxu0 0
        %2603 = vmatpush1.bf16.msra.mxu0 %v2594
        %2604 = vmatprep.subr.bf16.mxu0 0
        %2605 = vmatpush1.bf16.msra.mxu0 0
        %2606 = vmatprep.subr.bf16.mxu0 0
        %2607 = vmatpush1.bf16.msra.mxu0 0
        %2608 = vmatprep.subr.bf16.mxu0 0
        %2609 = vmatpush1.bf16.msra.mxu0 0
        %2610 = vmatprep.subr.bf16.mxu0 0
        %2611 = vmatpush1.bf16.msra.mxu0 0
        %2612 = vmatprep.subr.bf16.mxu0 0
        %2613 = vmatpush1.bf16.msra.mxu0 0
        %2614 = vmatprep.subr.bf16.mxu0 0
        %2615 = vmatpush1.bf16.msra.mxu0 0
        %2616 = vmatprep.subr.bf16.mxu0 0
        %2617 = vmatpush1.bf16.msra.mxu0 0
        %2618 = vmatprep.subr.bf16.mxu0 0
        %2619 = vmatpush1.bf16.msra.mxu0 0
        %2620 = vmatprep.subr.bf16.mxu0 0
        %2621 = vmatpush1.bf16.msra.mxu0 0
        %2622 = vmatprep.subr.bf16.mxu0 0
        %2623 = vmatpush1.bf16.msra.mxu0 0
        %2624 = vmatprep.subr.bf16.mxu0 0
        %2625 = vmatpush1.bf16.msra.mxu0 0
        %2626 = vmatprep.subr.bf16.mxu0 0
        %2627 = vmatpush1.bf16.msra.mxu0 0
        %2628 = vmatprep.subr.bf16.mxu0 0
        %2629 = vmatpush1.bf16.msra.mxu0 0
        %2630 = vmatprep.subr.bf16.mxu0 0
        %2631 = vmatpush1.bf16.msra.mxu0 0
        %2632 = vmatprep.mubr.bf16.mxu0 0
        %2633 = vmatmul.mubr.bf16.gmra.mrb[0].mxu0 %v2598
        %v2634 = vpop.f32.mrb[0].mxu0
        %v2635 = vadd.f32 %v2583, %v2634
        %v2636 = vpop.f32.mrb[0].mxu0
        %v2637 = vpop.f32.mrb[0].mxu0
        %v2638 = vpop.f32.mrb[0].mxu0
        %2639 = vdwg.mxu0
        %v2640 = vadd.f32 %v607, %v2635
        %v2641 = vld [vmem:[%s579] sm:$0x1]
        %v2642 = vld [vmem:[%s582] sm:$0x1]
        %v2643 = vsel %vm610, %v2640, 0.0
        %2644 = vadd.xlane.f32.xlu0 %v2643
        %v2645 = vpop.xlane.xlu0 %2644
        %v2646 = vmul.f32 %v2645, %v614
        %v2647 = vsub.f32 %v2640, %v2646
        %v2648 = vmul.f32 %v2647, %v2647
        %v2649 = vsel %vm610, %v2648, 0.0
        %2650 = vadd.xlane.f32.xlu0 %v2649
        %v2651 = vpop.xlane.xlu0 %2650
        %v2652 = vmul.f32 %v2651, %v614
        %v2653 = vadd.f32 %v2652, 1e-05
        %v2654 = vrsqrt.pop %v2653
        %v2655 = vmul.f32 %v2647, %v2654
        %v2657 = vlaneseq
        %v2658 = vshrl.u32 %v2657, 7
        %v2659 = vsub.s32 0, %v2658
        %v2660 = vrot.slane %v2641, %v2659
        %v2662 = vmul.f32 %v2655, %v2660
        %v2664 = vlaneseq
        %v2665 = vshrl.u32 %v2664, 7
        %v2666 = vsub.s32 0, %v2665
        %v2667 = vrot.slane %v2642, %v2666
        %v2669 = vadd.f32 %v2662, %v2667
        %v2670 = vpack.c.bf16 %v2669, %v2669
        %v2671 = vld [vmem:[%s587] sm:$0xf]
        %v2672 = vld [vmem:[%s587 + $0x4] sm:$0xf]
        %v2673 = vld [vmem:[%s587 + $0x8] sm:$0xf]
        %v2674 = vld [vmem:[%s587 + $0xc] sm:$0xf]
        %v2675 = vld [vmem:[%s590] sm:$0x1]
        %v2677 = vlaneseq
        %v2678 = vshrl.u32 %v2677, 7
        %v2679 = vsub.s32 0, %v2678
        %v2680 = vrot.slane %v2675, %v2679
        %v2686 = vunpack.c.l.b16 %v2671
        %v2687 = vunpack.c.l.b16 %v2672
        %v2688 = vunpack.c.l.b16 %v2673
        %v2689 = vunpack.c.l.b16 %v2674
        %v2690 = vpack.c.b16 %v2687, %v2686
        %v2691 = vpack.c.b16 %v2689, %v2688
        %v2695 = vsel %vm610, %v2670, 0
        %2697 = vmatprep.subr.bf16.mxu0 0
        %2698 = vmatpush1.bf16.msra.mxu0 %v2690
        %2699 = vmatprep.subr.bf16.mxu0 0
        %2700 = vmatpush1.bf16.msra.mxu0 %v2691
        %2701 = vmatprep.subr.bf16.mxu0 0
        %2702 = vmatpush1.bf16.msra.mxu0 0
        %2703 = vmatprep.subr.bf16.mxu0 0
        %2704 = vmatpush1.bf16.msra.mxu0 0
        %2705 = vmatprep.subr.bf16.mxu0 0
        %2706 = vmatpush1.bf16.msra.mxu0 0
        %2707 = vmatprep.subr.bf16.mxu0 0
        %2708 = vmatpush1.bf16.msra.mxu0 0
        %2709 = vmatprep.subr.bf16.mxu0 0
        %2710 = vmatpush1.bf16.msra.mxu0 0
        %2711 = vmatprep.subr.bf16.mxu0 0
        %2712 = vmatpush1.bf16.msra.mxu0 0
        %2713 = vmatprep.subr.bf16.mxu0 0
        %2714 = vmatpush1.bf16.msra.mxu0 0
        %2715 = vmatprep.subr.bf16.mxu0 0
        %2716 = vmatpush1.bf16.msra.mxu0 0
        %2717 = vmatprep.subr.bf16.mxu0 0
        %2718 = vmatpush1.bf16.msra.mxu0 0
        %2719 = vmatprep.subr.bf16.mxu0 0
        %2720 = vmatpush1.bf16.msra.mxu0 0
        %2721 = vmatprep.subr.bf16.mxu0 0
        %2722 = vmatpush1.bf16.msra.mxu0 0
        %2723 = vmatprep.subr.bf16.mxu0 0
        %2724 = vmatpush1.bf16.msra.mxu0 0
        %2725 = vmatprep.subr.bf16.mxu0 0
        %2726 = vmatpush1.bf16.msra.mxu0 0
        %2727 = vmatprep.subr.bf16.mxu0 0
        %2728 = vmatpush1.bf16.msra.mxu0 0
        %2729 = vmatprep.mubr.bf16.mxu0 0
        %2730 = vmatmul.mubr.bf16.gmra.mrb[0].mxu0 %v2695
        %v2731 = vpop.f32.mrb[0].mxu0
        %v2732 = vadd.f32 %v2680, %v2731
        %v2733 = vpop.f32.mrb[0].mxu0
        %v2734 = vpop.f32.mrb[0].mxu0
        %v2735 = vpop.f32.mrb[0].mxu0
        %2736 = vdwg.mxu0
        %v2737 = vmax.f32 %v2732, 0.0
        %v2738 = vpack.c.bf16 %v2737, %v2737
        %v2739 = vld [vmem:[%s595] sm:$0xf]
        %v2740 = vld [vmem:[%s595 + $0x4] sm:$0xf]
        %v2741 = vld [vmem:[%s595 + $0x8] sm:$0xf]
        %v2742 = vld [vmem:[%s595 + $0xc] sm:$0xf]
        %v2743 = vld [vmem:[%s595 + $0x10] sm:$0xf]
        %v2744 = vld [vmem:[%s595 + $0x14] sm:$0xf]
        %v2745 = vld [vmem:[%s595 + $0x18] sm:$0xf]
        %v2746 = vld [vmem:[%s595 + $0x1c] sm:$0xf]
        %v2747 = vld [vmem:[%s595 + $0x20] sm:$0xf]
        %v2748 = vld [vmem:[%s595 + $0x24] sm:$0xf]
        %v2749 = vld [vmem:[%s595 + $0x28] sm:$0xf]
        %v2750 = vld [vmem:[%s595 + $0x2c] sm:$0xf]
        %v2751 = vld [vmem:[%s595 + $0x30] sm:$0xf]
        %v2752 = vld [vmem:[%s595 + $0x34] sm:$0xf]
        %v2753 = vld [vmem:[%s595 + $0x38] sm:$0xf]
        %v2754 = vld [vmem:[%s595 + $0x3c] sm:$0xf]
        %v2755 = vld [vmem:[%s598] sm:$0x1]
        %v2757 = vlaneseq
        %v2758 = vshrl.u32 %v2757, 7
        %v2759 = vsub.s32 0, %v2758
        %v2760 = vrot.slane %v2755, %v2759
        %v2778 = vunpack.c.l.b16 %v2739
        %v2779 = vunpack.c.l.b16 %v2740
        %v2780 = vunpack.c.l.b16 %v2741
        %v2781 = vunpack.c.l.b16 %v2742
        %v2782 = vunpack.c.l.b16 %v2743
        %v2783 = vunpack.c.l.b16 %v2744
        %v2784 = vunpack.c.l.b16 %v2745
        %v2785 = vunpack.c.l.b16 %v2746
        %v2786 = vunpack.c.l.b16 %v2747
        %v2787 = vunpack.c.l.b16 %v2748
        %v2788 = vunpack.c.l.b16 %v2749
        %v2789 = vunpack.c.l.b16 %v2750
        %v2790 = vunpack.c.l.b16 %v2751
        %v2791 = vunpack.c.l.b16 %v2752
        %v2792 = vunpack.c.l.b16 %v2753
        %v2793 = vunpack.c.l.b16 %v2754
        %v2794 = vpack.c.b16 %v2779, %v2778
        %v2795 = vpack.c.b16 %v2781, %v2780
        %v2796 = vpack.c.b16 %v2783, %v2782
        %v2797 = vpack.c.b16 %v2785, %v2784
        %v2798 = vpack.c.b16 %v2787, %v2786
        %v2799 = vpack.c.b16 %v2789, %v2788
        %v2800 = vpack.c.b16 %v2791, %v2790
        %v2801 = vpack.c.b16 %v2793, %v2792
        %2810 = vmatprep.subr.bf16.mxu0 0
        %2811 = vmatpush1.bf16.msra.mxu0 %v2794
        %2812 = vmatprep.subr.bf16.mxu0 0
        %2813 = vmatpush1.bf16.msra.mxu0 %v2795
        %2814 = vmatprep.subr.bf16.mxu0 0
        %2815 = vmatpush1.bf16.msra.mxu0 %v2796
        %2816 = vmatprep.subr.bf16.mxu0 0
        %2817 = vmatpush1.bf16.msra.mxu0 %v2797
        %2818 = vmatprep.subr.bf16.mxu0 0
        %2819 = vmatpush1.bf16.msra.mxu0 %v2798
        %2820 = vmatprep.subr.bf16.mxu0 0
        %2821 = vmatpush1.bf16.msra.mxu0 %v2799
        %2822 = vmatprep.subr.bf16.mxu0 0
        %2823 = vmatpush1.bf16.msra.mxu0 %v2800
        %2824 = vmatprep.subr.bf16.mxu0 0
        %2825 = vmatpush1.bf16.msra.mxu0 %v2801
        %2826 = vmatprep.subr.bf16.mxu0 0
        %2827 = vmatpush1.bf16.msra.mxu0 0
        %2828 = vmatprep.subr.bf16.mxu0 0
        %2829 = vmatpush1.bf16.msra.mxu0 0
        %2830 = vmatprep.subr.bf16.mxu0 0
        %2831 = vmatpush1.bf16.msra.mxu0 0
        %2832 = vmatprep.subr.bf16.mxu0 0
        %2833 = vmatpush1.bf16.msra.mxu0 0
        %2834 = vmatprep.subr.bf16.mxu0 0
        %2835 = vmatpush1.bf16.msra.mxu0 0
        %2836 = vmatprep.subr.bf16.mxu0 0
        %2837 = vmatpush1.bf16.msra.mxu0 0
        %2838 = vmatprep.subr.bf16.mxu0 0
        %2839 = vmatpush1.bf16.msra.mxu0 0
        %2840 = vmatprep.subr.bf16.mxu0 0
        %2841 = vmatpush1.bf16.msra.mxu0 0
        %2842 = vmatprep.mubr.bf16.mxu0 0
        %2843 = vmatmul.mubr.bf16.gmra.mrb[0].mxu0 %v2738
        %v2844 = vpop.f32.mrb[0].mxu0
        %v2845 = vadd.f32 %v2760, %v2844
        %v2846 = vpop.f32.mrb[0].mxu0
        %v2847 = vpop.f32.mrb[0].mxu0
        %v2848 = vpop.f32.mrb[0].mxu0
        %2849 = vdwg.mxu0
        %v2850 = vadd.f32 %v2640, %v2845
        %2851 = vst.msk [vmem:[%s553] sm:$0xff] %vm610, %v2850
        %s2852 = sand.u32 %s358, 1
        %s2853 = scalar_lea.sflag [#allocation3], %s2852
        %s2854 = sand.u32 %s358, 1
        %s2855 = smul.addr %s2854, 8
        %s2856 = scalar_lea.vmem [#allocation2], %s2855
        // Predicated region
        $region73: #{tpu_custom_call.1} parent=67 // pred_check
          %p2857 = pneg %p368
        $region74: #{tpu_custom_call.1} parent=67 // pred_check_branch
          %2859 = sbr.rel (%p2857) target = $region76
        $region75: #{tpu_custom_call.1} parent=67 // pred_region
          %s2861 = ssub.s32 128, 128
          %2862 = vsyncadd %s2853, %s2861
          %s2863 = smul.addr %s30, 128
          %s2864 = scalar_lea.hbm %s12, %s2863
          %s2866 = sshll.u32 %s2856, 4
          %s2867 = int_to_ptr.vmem [resolvable:$true] %s2866
          %2869 = dma.vmem_to_hbm [thread:$0]  %s2867, 128, %s2864, %s2853
        $region76: #{tpu_custom_call.1} parent=67 // pred_fallthru
          _
      $region68: #{tpu_custom_call.1} parent=5 // pred_fallthru
        _
      %p2870 = scmp.le.s32.totalorder 2, %s21
      // Predicated region
      $region77: #{tpu_custom_call.1} parent=5 // pred_check
        %p2871 = pneg %p2870
      $region78: #{tpu_custom_call.1} parent=5 // pred_check_branch
        %2873 = sbr.rel (%p2871) target = $region80
      $region79: #{tpu_custom_call.1} parent=5 // pred_region
        %s2874 = ssub.s32 %s21, 2
        // Predicated region
        $region81: #{tpu_custom_call.1} parent=79 // pred_check
          %p2875 = pneg %p374
        $region82: #{tpu_custom_call.1} parent=79 // pred_check_branch
          %2877 = sbr.rel (%p2875) target = $region84
        $region83: #{tpu_custom_call.1} parent=79 // pred_region
          %s2878 = sand.u32 %s359, 1
          %s2879 = scalar_lea.sflag [#allocation3], %s2878
          %s2880 = sand.u32 %s359, 1
          %s2881 = smul.addr %s2880, 8
          %s2882 = scalar_lea.vmem [#allocation2], %s2881
          %2883 = dma.done %s2879, 128
        $region84: #{tpu_custom_call.1} parent=79 // pred_fallthru
          _
      $region80: #{tpu_custom_call.1} parent=5 // pred_fallthru
        _
    $region6: #{tpu_custom_call.1} parent=1 // loop_footer
      %s25 = sadd.s32 1, %s21
    $region7: #{tpu_custom_call.1} parent=1 // loop_footer_branch
      %20 = sbr.rel target = $region3
    $region8: #{tpu_custom_call.1} parent=1 // loop_exit
      _
    %2884 = vsyncpa [#allocation3], 1
    %s2885 = scalar_lea.sflag [#allocation3], 1
    %2886 = vsyncpa %s2885, 1

</llo_original>
